<compile_context>
chip_gen: v7x
topology: tpu7x:2x2x1
jax: 0.10.0
libtpu: 0.0.40
codegen_flags: <defaults>
</compile_context>

<pallas_src>
import functools

import jax
import jax.numpy as jnp
from jax.experimental import pallas as pl
from jax.experimental.pallas import tpu as pltpu


def _round_up(x, m):
    return ((x + m - 1) // m) * m


# ----------------------------- Pass 1 kernel --------------------------------
def _node_transform_kernel(x_ref, w1_ref, b1_ref, w2_ref, b2_ref, lam_ref,
                           z_ref, y_ref, *, num_rel):
    """One node tile, all relations.  Writes z / (z @ Lambda) packed over R."""
    x = x_ref[...]                                    # (tile_n, in_dim) f32
    zs, ys = [], []
    for r in range(num_rel):                          # static unroll, R is tiny
        h = jnp.dot(x, w1_ref[r], preferred_element_type=jnp.float32) + b1_ref[r]
        h = jnp.tanh(h)                               # tanh kept in f32 (v5e EUP)
        z = jnp.dot(h, w2_ref[r], preferred_element_type=jnp.float32) + b2_ref[r]
        z = jnp.tanh(z)                               # (tile_n, D) f32
        y = jnp.dot(z, lam_ref[r], preferred_element_type=jnp.float32)
        zs.append(z)
        ys.append(y)
    # Single (lane width R*D) store per output instead of R narrow stores.
    z_ref[...] = jnp.concatenate(zs, axis=-1).astype(z_ref.dtype)
    y_ref[...] = jnp.concatenate(ys, axis=-1).astype(y_ref.dtype)


# ----------------------------- Pass 2 kernel --------------------------------
def _sbm_outer_kernel(y_ref, z_ref, o_ref):
    """out[i_tile, j_tile] = y_packed[i_tile] @ z_packed[j_tile].T  (K = R*D).

    sum_r y_r @ z_r.T == y_packed @ z_packed.T, so no reduction grid axis and
    no resident accumulator are needed; each output block is written once.
    """
    o_ref[...] = jax.lax.dot_general(
        y_ref[...], z_ref[...],
        dimension_numbers=(((1,), (1,)), ((), ())),
        preferred_element_type=jnp.float32).astype(o_ref.dtype)


# ------------------------------- Wrapper -------------------------------------
def multi_latent_sbm_decoder(x, w1, b1, w2, b2, lambdas, *, tile_n=512,
                             packed_dtype=jnp.bfloat16,
                             out_dtype=jnp.float32):
    """x: (N, in_dim); w1: (R, in_dim, H); b1: (R, H); w2: (R, H, D); b2: (R, D);
    lambdas: (R, D, D)  ->  (N, N) out_dtype adjacency."""
    N, in_dim = x.shape
    R, in_dim2, hidden = w1.shape
    _, hidden2, D = w2.shape
    assert in_dim2 == in_dim and hidden2 == hidden
    assert b1.shape == (R, hidden) and b2.shape == (R, D)
    assert lambdas.shape == (R, D, D)
    kdim = R * D

    # Tile choice: multiple of 128, no larger than needed for this N, and at
    # least two tiles per parallel axis when N allows it (v7x megacore).
    half = _round_up(max(pl.cdiv(N, 2), 1), 128)
    tile_n = max(128, min(_round_up(tile_n, 128), half))
    n_pad = _round_up(N, tile_n)
    n_tiles = n_pad // tile_n

    x = x.astype(jnp.float32)
    if n_pad != N:
        x = jnp.pad(x, ((0, n_pad - N), (0, 0)))

    w1 = w1.astype(jnp.float32)
    w2 = w2.astype(jnp.float32)
    lambdas = lambdas.astype(jnp.float32)
    b1 = b1.reshape(R, 1, hidden).astype(jnp.float32)
    b2 = b2.reshape(R, 1, D).astype(jnp.float32)

    # ---- Pass 1: per-relation node MLP + Lambda pre-multiply, R-packed ------
    kernel1 = functools.partial(_node_transform_kernel, num_rel=R)
    z, y = pl.pallas_call(
        kernel1,
        out_shape=(jax.ShapeDtypeStruct((n_pad, kdim), packed_dtype),
                   jax.ShapeDtypeStruct((n_pad, kdim), packed_dtype)),
        grid_spec=pltpu.PrefetchScalarGridSpec(
            num_scalar_prefetch=0,
            grid=(n_tiles,),
            in_specs=[
                pl.BlockSpec((tile_n, in_dim), lambda i: (i, 0)),
                pl.BlockSpec((R, in_dim, hidden), lambda i: (0, 0, 0)),
                pl.BlockSpec((R, 1, hidden), lambda i: (0, 0, 0)),
                pl.BlockSpec((R, hidden, D), lambda i: (0, 0, 0)),
                pl.BlockSpec((R, 1, D), lambda i: (0, 0, 0)),
                pl.BlockSpec((R, D, D), lambda i: (0, 0, 0)),
            ],
            out_specs=[
                pl.BlockSpec((tile_n, kdim), lambda i: (i, 0)),
                pl.BlockSpec((tile_n, kdim), lambda i: (i, 0)),
            ],
        ),
        compiler_params=pltpu.CompilerParams(
            dimension_semantics=("parallel",)),
    )(x, w1, b1, w2, b2, lambdas)

    # ---- Pass 2: out = y_packed @ z_packed.T  (single write per block) ------
    itemsize_out = jnp.dtype(out_dtype).itemsize
    itemsize_in = jnp.dtype(packed_dtype).itemsize
    vmem_needed = (2 * tile_n * tile_n * itemsize_out          # dbl-buffered out
                   + 4 * tile_n * kdim * itemsize_in           # dbl-buffered ins
                   + (2 << 20))
    vmem_limit = int(min(max(vmem_needed, 32 << 20), 48 << 20))  # v7x-safe cap

    out = pl.pallas_call(
        _sbm_outer_kernel,
        out_shape=jax.ShapeDtypeStruct((n_pad, n_pad), out_dtype),
        grid_spec=pltpu.PrefetchScalarGridSpec(
            num_scalar_prefetch=0,
            grid=(n_tiles, n_tiles),
            in_specs=[
                pl.BlockSpec((tile_n, kdim), lambda i, j: (i, 0)),   # y rows
                pl.BlockSpec((tile_n, kdim), lambda i, j: (j, 0)),   # z cols
            ],
            out_specs=pl.BlockSpec((tile_n, tile_n), lambda i, j: (i, j)),
        ),
        compiler_params=pltpu.CompilerParams(
            dimension_semantics=("parallel", "parallel"),
            vmem_limit_bytes=vmem_limit),
    )(y, z)

    return out[:N, :N]


# ------------------------------ Reference ------------------------------------
def reference_forward(x, w1, b1, w2, b2, lambdas):
    out = None
    for r in range(w1.shape[0]):
        h = jnp.tanh(x @ w1[r] + b1[r])
        z = jnp.tanh(h @ w2[r] + b2[r])
        g = z @ (lambdas[r] @ z.T)
        out = g if out is None else out + g
    return out


if __name__ == "__main__":
    key = jax.random.PRNGKey(0)
    k_x, k_w1, k_b1, k_w2, k_b2, k_lam = jax.random.split(key, 6)

    number_of_rel = 2
    in_dim = 16
    hidden = 32            # node_trns_layers = [32]
    lambda_dim = 16
    num_nodes = 200        # deliberately NOT a multiple of the output tile

    x = jax.random.normal(k_x, (num_nodes, in_dim), jnp.float32)

    # nn.Linear-style init (uniform +-1/sqrt(fan_in)); xavier_uniform for Lambda.
    bound1 = 1.0 / jnp.sqrt(in_dim)
    bound2 = 1.0 / jnp.sqrt(hidden)
    w1 = jax.random.uniform(k_w1, (number_of_rel, in_dim, hidden),
                            jnp.float32, -bound1, bound1)
    b1 = jax.random.uniform(k_b1, (number_of_rel, hidden),
                            jnp.float32, -bound1, bound1)
    w2 = jax.random.uniform(k_w2, (number_of_rel, hidden, lambda_dim),
                            jnp.float32, -bound2, bound2)
    b2 = jax.random.uniform(k_b2, (number_of_rel, lambda_dim),
                            jnp.float32, -bound2, bound2)
    xav = jnp.sqrt(6.0 / (lambda_dim + lambda_dim))
    lambdas = jax.random.uniform(k_lam, (number_of_rel, lambda_dim, lambda_dim),
                                 jnp.float32, -xav, xav)

    out = multi_latent_sbm_decoder(x, w1, b1, w2, b2, lambdas)
    out = jax.block_until_ready(out)

    ref = reference_forward(x, w1, b1, w2, b2, lambdas)
    assert out.shape == (num_nodes, num_nodes)
    max_err = float(jnp.max(jnp.abs(out - ref)))
    # z / y are stored in bf16 (f32 accumulation in the MXU); tolerance reflects
    # bf16 rounding of the K=32 contraction inputs.
    assert jnp.allclose(out, ref, atol=5e-2, rtol=5e-2), max_err

    print("KERNEL_OK")
</pallas_src>

<mosaic_0001>
module attributes {stable_mosaic.version = 11 : i64} {
  func.func @_node_transform_kernel(%arg0: i32, %arg1: memref<128x16xf32, #tpu.memory_space<vmem>>, %arg2: memref<2x16x32xf32, #tpu.memory_space<vmem>>, %arg3: memref<2x1x32xf32, #tpu.memory_space<vmem>>, %arg4: memref<2x32x16xf32, #tpu.memory_space<vmem>>, %arg5: memref<2x1x16xf32, #tpu.memory_space<vmem>>, %arg6: memref<2x16x16xf32, #tpu.memory_space<vmem>>, %arg7: memref<128x32xbf16, #tpu.memory_space<vmem>>, %arg8: memref<128x32xbf16, #tpu.memory_space<vmem>>) attributes {dimension_semantics = [#tpu.dimension_semantics<parallel>], iteration_bounds = array<i64: 2>, scalar_prefetch = 0 : i64, scratch_operands = 0 : i64, tpu.core_type = #tpu.core_type<tc>, window_params = [{transform_indices = @transform_0, window_bounds = array<i64: 128, 16>}, {pipeline_mode = #tpu.pipeline_mode<synchronous>, transform_indices = @transform_1, window_bounds = array<i64: 2, 16, 32>}, {pipeline_mode = #tpu.pipeline_mode<synchronous>, transform_indices = @transform_2, window_bounds = array<i64: 2, 1, 32>}, {pipeline_mode = #tpu.pipeline_mode<synchronous>, transform_indices = @transform_3, window_bounds = array<i64: 2, 32, 16>}, {pipeline_mode = #tpu.pipeline_mode<synchronous>, transform_indices = @transform_4, window_bounds = array<i64: 2, 1, 16>}, {pipeline_mode = #tpu.pipeline_mode<synchronous>, transform_indices = @transform_5, window_bounds = array<i64: 2, 16, 16>}, {transform_indices = @transform_6, window_bounds = array<i64: 128, 32>}, {transform_indices = @transform_7, window_bounds = array<i64: 128, 32>}]} {
    %c0 = arith.constant 0 : index
    %c0_0 = arith.constant 0 : index
    %0 = vector.load %arg1[%c0, %c0_0] : memref<128x16xf32, #tpu.memory_space<vmem>>, vector<128x16xf32>
    %c0_1 = arith.constant 0 : index
    %c0_2 = arith.constant 0 : index
    %c0_3 = arith.constant 0 : index
    %1 = vector.load %arg2[%c0_1, %c0_2, %c0_3] : memref<2x16x32xf32, #tpu.memory_space<vmem>>, vector<1x16x32xf32>
    %2 = vector.shape_cast %1 : vector<1x16x32xf32> to vector<16x32xf32>
    %cst = arith.constant dense<0.000000e+00> : vector<128x32xf32>
    %3 = tpu.matmul %0, %2, %cst {dimension_numbers = #tpu.dot_dimension_numbers<[1], [0], [0], [1], [0, 0, 1, 1], [], []>} : vector<128x16xf32>, vector<16x32xf32>, vector<128x32xf32> -> vector<128x32xf32>
    %c0_4 = arith.constant 0 : index
    %c0_5 = arith.constant 0 : index
    %c0_6 = arith.constant 0 : index
    %4 = vector.load %arg3[%c0_4, %c0_5, %c0_6] : memref<2x1x32xf32, #tpu.memory_space<vmem>>, vector<1x1x32xf32>
    %5 = vector.shape_cast %4 : vector<1x1x32xf32> to vector<1x32xf32>
    %6 = vector.broadcast %5 : vector<1x32xf32> to vector<128x32xf32>
    %7 = arith.addf %3, %6 : vector<128x32xf32>
    %8 = math.tanh %7 : vector<128x32xf32>
    %c0_7 = arith.constant 0 : index
    %c0_8 = arith.constant 0 : index
    %c0_9 = arith.constant 0 : index
    %9 = vector.load %arg4[%c0_7, %c0_8, %c0_9] : memref<2x32x16xf32, #tpu.memory_space<vmem>>, vector<1x32x16xf32>
    %10 = vector.shape_cast %9 : vector<1x32x16xf32> to vector<32x16xf32>
    %cst_10 = arith.constant dense<0.000000e+00> : vector<128x16xf32>
    %11 = tpu.matmul %8, %10, %cst_10 {dimension_numbers = #tpu.dot_dimension_numbers<[1], [0], [0], [1], [0, 0, 1, 1], [], []>} : vector<128x32xf32>, vector<32x16xf32>, vector<128x16xf32> -> vector<128x16xf32>
    %c0_11 = arith.constant 0 : index
    %c0_12 = arith.constant 0 : index
    %c0_13 = arith.constant 0 : index
    %12 = vector.load %arg5[%c0_11, %c0_12, %c0_13] : memref<2x1x16xf32, #tpu.memory_space<vmem>>, vector<1x1x16xf32>
    %13 = vector.shape_cast %12 : vector<1x1x16xf32> to vector<1x16xf32>
    %14 = vector.broadcast %13 : vector<1x16xf32> to vector<128x16xf32>
    %15 = arith.addf %11, %14 : vector<128x16xf32>
    %16 = math.tanh %15 : vector<128x16xf32>
    %c0_14 = arith.constant 0 : index
    %c0_15 = arith.constant 0 : index
    %c0_16 = arith.constant 0 : index
    %17 = vector.load %arg6[%c0_14, %c0_15, %c0_16] : memref<2x16x16xf32, #tpu.memory_space<vmem>>, vector<1x16x16xf32>
    %18 = vector.shape_cast %17 : vector<1x16x16xf32> to vector<16x16xf32>
    %cst_17 = arith.constant dense<0.000000e+00> : vector<128x16xf32>
    %19 = tpu.matmul %16, %18, %cst_17 {dimension_numbers = #tpu.dot_dimension_numbers<[1], [0], [0], [1], [0, 0, 1, 1], [], []>} : vector<128x16xf32>, vector<16x16xf32>, vector<128x16xf32> -> vector<128x16xf32>
    %c1 = arith.constant 1 : index
    %c0_18 = arith.constant 0 : index
    %c0_19 = arith.constant 0 : index
    %20 = vector.load %arg2[%c1, %c0_18, %c0_19] : memref<2x16x32xf32, #tpu.memory_space<vmem>>, vector<1x16x32xf32>
    %21 = vector.shape_cast %20 : vector<1x16x32xf32> to vector<16x32xf32>
    %cst_20 = arith.constant dense<0.000000e+00> : vector<128x32xf32>
    %22 = tpu.matmul %0, %21, %cst_20 {dimension_numbers = #tpu.dot_dimension_numbers<[1], [0], [0], [1], [0, 0, 1, 1], [], []>} : vector<128x16xf32>, vector<16x32xf32>, vector<128x32xf32> -> vector<128x32xf32>
    %c1_21 = arith.constant 1 : index
    %c0_22 = arith.constant 0 : index
    %c0_23 = arith.constant 0 : index
    %23 = vector.load %arg3[%c1_21, %c0_22, %c0_23] : memref<2x1x32xf32, #tpu.memory_space<vmem>>, vector<1x1x32xf32>
    %24 = vector.shape_cast %23 : vector<1x1x32xf32> to vector<1x32xf32>
    %25 = vector.broadcast %24 : vector<1x32xf32> to vector<128x32xf32>
    %26 = arith.addf %22, %25 : vector<128x32xf32>
    %27 = math.tanh %26 : vector<128x32xf32>
    %c1_24 = arith.constant 1 : index
    %c0_25 = arith.constant 0 : index
    %c0_26 = arith.constant 0 : index
    %28 = vector.load %arg4[%c1_24, %c0_25, %c0_26] : memref<2x32x16xf32, #tpu.memory_space<vmem>>, vector<1x32x16xf32>
    %29 = vector.shape_cast %28 : vector<1x32x16xf32> to vector<32x16xf32>
    %cst_27 = arith.constant dense<0.000000e+00> : vector<128x16xf32>
    %30 = tpu.matmul %27, %29, %cst_27 {dimension_numbers = #tpu.dot_dimension_numbers<[1], [0], [0], [1], [0, 0, 1, 1], [], []>} : vector<128x32xf32>, vector<32x16xf32>, vector<128x16xf32> -> vector<128x16xf32>
    %c1_28 = arith.constant 1 : index
    %c0_29 = arith.constant 0 : index
    %c0_30 = arith.constant 0 : index
    %31 = vector.load %arg5[%c1_28, %c0_29, %c0_30] : memref<2x1x16xf32, #tpu.memory_space<vmem>>, vector<1x1x16xf32>
    %32 = vector.shape_cast %31 : vector<1x1x16xf32> to vector<1x16xf32>
    %33 = vector.broadcast %32 : vector<1x16xf32> to vector<128x16xf32>
    %34 = arith.addf %30, %33 : vector<128x16xf32>
    %35 = math.tanh %34 : vector<128x16xf32>
    %c1_31 = arith.constant 1 : index
    %c0_32 = arith.constant 0 : index
    %c0_33 = arith.constant 0 : index
    %36 = vector.load %arg6[%c1_31, %c0_32, %c0_33] : memref<2x16x16xf32, #tpu.memory_space<vmem>>, vector<1x16x16xf32>
    %37 = vector.shape_cast %36 : vector<1x16x16xf32> to vector<16x16xf32>
    %cst_34 = arith.constant dense<0.000000e+00> : vector<128x16xf32>
    %38 = tpu.matmul %35, %37, %cst_34 {dimension_numbers = #tpu.dot_dimension_numbers<[1], [0], [0], [1], [0, 0, 1, 1], [], []>} : vector<128x16xf32>, vector<16x16xf32>, vector<128x16xf32> -> vector<128x16xf32>
    %39 = tpu.concatenate %16, %35 in 1 : vector<128x16xf32>, vector<128x16xf32> -> vector<128x32xf32>
    %40 = arith.truncf %39 : vector<128x32xf32> to vector<128x32xbf16>
    %c0_35 = arith.constant 0 : index
    %c0_36 = arith.constant 0 : index
    %41 = vector.load %arg7[%c0_35, %c0_36] : memref<128x32xbf16, #tpu.memory_space<vmem>>, vector<128x32xbf16>
    tpu.vector_store %arg7[%c0_35, %c0_36], %40 {strides = array<i32>} : memref<128x32xbf16, #tpu.memory_space<vmem>>, vector<128x32xbf16>,
    %42 = tpu.concatenate %19, %38 in 1 : vector<128x16xf32>, vector<128x16xf32> -> vector<128x32xf32>
    %43 = arith.truncf %42 : vector<128x32xf32> to vector<128x32xbf16>
    %c0_37 = arith.constant 0 : index
    %c0_38 = arith.constant 0 : index
    %44 = vector.load %arg8[%c0_37, %c0_38] : memref<128x32xbf16, #tpu.memory_space<vmem>>, vector<128x32xbf16>
    tpu.vector_store %arg8[%c0_37, %c0_38], %43 {strides = array<i32>} : memref<128x32xbf16, #tpu.memory_space<vmem>>, vector<128x32xbf16>,
    return
  }
  func.func @transform_0(%arg0: i32) -> (i32, i32) {
    %c0_i32 = arith.constant 0 : i32
    %c0_i32_0 = arith.constant 0 : i32
    return %arg0, %c0_i32 : i32, i32
  }
  func.func @transform_1(%arg0: i32) -> (i32, i32, i32) {
    %c0_i32 = arith.constant 0 : i32
    %c0_i32_0 = arith.constant 0 : i32
    %c0_i32_1 = arith.constant 0 : i32
    %c0_i32_2 = arith.constant 0 : i32
    return %c0_i32, %c0_i32_0, %c0_i32_1 : i32, i32, i32
  }
  func.func @transform_2(%arg0: i32) -> (i32, i32, i32) {
    %c0_i32 = arith.constant 0 : i32
    %c0_i32_0 = arith.constant 0 : i32
    %c0_i32_1 = arith.constant 0 : i32
    %c0_i32_2 = arith.constant 0 : i32
    return %c0_i32, %c0_i32_0, %c0_i32_1 : i32, i32, i32
  }
  func.func @transform_3(%arg0: i32) -> (i32, i32, i32) {
    %c0_i32 = arith.constant 0 : i32
    %c0_i32_0 = arith.constant 0 : i32
    %c0_i32_1 = arith.constant 0 : i32
    %c0_i32_2 = arith.constant 0 : i32
    return %c0_i32, %c0_i32_0, %c0_i32_1 : i32, i32, i32
  }
  func.func @transform_4(%arg0: i32) -> (i32, i32, i32) {
    %c0_i32 = arith.constant 0 : i32
    %c0_i32_0 = arith.constant 0 : i32
    %c0_i32_1 = arith.constant 0 : i32
    %c0_i32_2 = arith.constant 0 : i32
    return %c0_i32, %c0_i32_0, %c0_i32_1 : i32, i32, i32
  }
  func.func @transform_5(%arg0: i32) -> (i32, i32, i32) {
    %c0_i32 = arith.constant 0 : i32
    %c0_i32_0 = arith.constant 0 : i32
    %c0_i32_1 = arith.constant 0 : i32
    %c0_i32_2 = arith.constant 0 : i32
    return %c0_i32, %c0_i32_0, %c0_i32_1 : i32, i32, i32
  }
  func.func @transform_6(%arg0: i32) -> (i32, i32) {
    %c0_i32 = arith.constant 0 : i32
    %c0_i32_0 = arith.constant 0 : i32
    return %arg0, %c0_i32 : i32, i32
  }
  func.func @transform_7(%arg0: i32) -> (i32, i32) {
    %c0_i32 = arith.constant 0 : i32
    %c0_i32_0 = arith.constant 0 : i32
    return %arg0, %c0_i32 : i32, i32
  }
}

</mosaic_0001>

<llo_original>
// kernel: tpu_custom_call.1
$region0: #{tpu_custom_call.1}
  #allocation0 [shape = 'u32[]', space=smem, size = 0x4, offset = 0x4, fixed_abs, tag = 'smem constant byte address 0x4 - core index']
  #allocation1 [shape = 'u32[144,128]{1,0:T(1,128)}', space=vmem, size = 0x12000, scoped, tag = 'internal scratch']
  %s0 = inlined_call_operand.vmem [shape: f32[256,16], index: 0, kind: input, shape index: {}]
  %s1 = inlined_call_operand.vmem [shape: f32[2,16,32], index: 1, kind: input, shape index: {}]
  %s2 = inlined_call_operand.vmem [shape: f32[2,1,32], index: 2, kind: input, shape index: {}]
  %s3 = inlined_call_operand.vmem [shape: f32[2,32,16], index: 3, kind: input, shape index: {}]
  %s4 = inlined_call_operand.vmem [shape: f32[2,1,16], index: 4, kind: input, shape index: {}]
  %s5 = inlined_call_operand.vmem [shape: f32[2,16,16], index: 5, kind: input, shape index: {}]
  %s6 = inlined_call_operand.vmem [shape: bf16[256,32], index: 6, kind: output, shape index: {0}]
  %s7 = inlined_call_operand.vmem [shape: bf16[256,32], index: 7, kind: output, shape index: {1}]
  %8 = xla_tuple %s6, %s7
  %s9 = sld [smem:[#allocation0]]
  $region65: #{tpu_custom_call.1} parent=0
    _
  %s11 = ssub.s32 1, %s9
  %s12 = scalar_select 0, %s11, %s9
  loop: start=0, step=1, limit=4
  $region2: #{tpu_custom_call.1} parent=0 // loop_pre_header
    _
  $region3: #{tpu_custom_call.1} parent=0 // loop_header
    %s14 = sphi 0, %s18
    %p15 = scmp.ge.s32.totalorder %s14, 4
    %s24 = sphi 0, %s26
    %s27 = sphi 0, %s24
    %s28 = sphi 0, %s27
    %s44 = sphi 0, %s28
    %s48 = sphi 0, %s48
    %s50 = sphi 0, %s48
    %s51 = sphi 0, %s50
    %s65 = sphi 0, %s51
    %s69 = sphi 0, %s69
    %s71 = sphi 0, %s69
    %s72 = sphi 0, %s71
    %s86 = sphi 0, %s72
    %s90 = sphi 0, %s90
    %s92 = sphi 0, %s90
    %s93 = sphi 0, %s92
    %s107 = sphi 0, %s93
    %s111 = sphi 0, %s111
    %s113 = sphi 0, %s111
    %s114 = sphi 0, %s113
    %s128 = sphi 0, %s114
    %s132 = sphi 0, %s132
    %s134 = sphi 0, %s132
    %s135 = sphi 0, %s134
    %s149 = sphi 0, %s135
    %s155 = sphi 0, %s157
    %s158 = sphi 0, %s155
    %s159 = sphi 0, %s158
    %s175 = sphi 0, %s159
    %s181 = sphi 0, %s183
    %s184 = sphi 0, %s181
    %s185 = sphi 0, %s184
    %s201 = sphi 0, %s185
  $region4: #{tpu_custom_call.1} parent=0 // loop_header_branch
    %17 = sbr.rel (%p15) target = $region8
  $region5: #{tpu_custom_call.1} parent=0 // loop_body
    %s19 = ssub.s32 %s14, 1
    %s20 = ssub.s32 %s14, 2
    %s21 = sadd.s32 %s14, 1
    %s22 = ssub.s32 %s14, %s21
    %p23 = scmp.eq.s32.totalorder %s22, 0
    %s25 = sadd.s32 %s24, 1
    %s26 = scalar_select %p23, %s24, %s25
    %p29 = pneg %p23
    %p30 = scmp.eq.s32.totalorder %s14, 1
    %p31 = por %p29, %p30
    %p32 = scmp.ne.s32.totalorder %s24, %s27
    %p33 = scmp.eq.s32.totalorder %s14, 0
    %p34 = por %p32, %p33
    %p35 = scmp.ne.s32.totalorder %s24, %s27
    %p36 = scmp.eq.s32.totalorder %s19, 1
    %p37 = por %p35, %p36
    %p38 = scmp.ne.s32.totalorder %s27, %s28
    %p39 = scmp.eq.s32.totalorder %s19, 0
    %p40 = por %p38, %p39
    %p41 = scmp.ne.s32.totalorder %s27, %s28
    %p42 = scmp.eq.s32.totalorder %s20, 1
    %p43 = por %p41, %p42
    %p45 = scmp.ne.s32.totalorder %s28, %s44
    %p46 = scmp.eq.s32.totalorder %s20, 0
    %p47 = por %p45, %p46
    %s49 = sadd.s32 %s48, 1
    %p52 = scmp.eq.s32.totalorder %s14, 1
    %p53 = scmp.ne.s32.totalorder %s48, %s50
    %p54 = scmp.eq.s32.totalorder %s14, 0
    %p55 = por %p53, %p54
    %p56 = scmp.ne.s32.totalorder %s48, %s50
    %p57 = scmp.eq.s32.totalorder %s19, 1
    %p58 = por %p56, %p57
    %p59 = scmp.ne.s32.totalorder %s50, %s51
    %p60 = scmp.eq.s32.totalorder %s19, 0
    %p61 = por %p59, %p60
    %p62 = scmp.ne.s32.totalorder %s50, %s51
    %p63 = scmp.eq.s32.totalorder %s20, 1
    %p64 = por %p62, %p63
    %p66 = scmp.ne.s32.totalorder %s51, %s65
    %p67 = scmp.eq.s32.totalorder %s20, 0
    %p68 = por %p66, %p67
    %s70 = sadd.s32 %s69, 1
    %p73 = scmp.eq.s32.totalorder %s14, 1
    %p74 = scmp.ne.s32.totalorder %s69, %s71
    %p75 = scmp.eq.s32.totalorder %s14, 0
    %p76 = por %p74, %p75
    %p77 = scmp.ne.s32.totalorder %s69, %s71
    %p78 = scmp.eq.s32.totalorder %s19, 1
    %p79 = por %p77, %p78
    %p80 = scmp.ne.s32.totalorder %s71, %s72
    %p81 = scmp.eq.s32.totalorder %s19, 0
    %p82 = por %p80, %p81
    %p83 = scmp.ne.s32.totalorder %s71, %s72
    %p84 = scmp.eq.s32.totalorder %s20, 1
    %p85 = por %p83, %p84
    %p87 = scmp.ne.s32.totalorder %s72, %s86
    %p88 = scmp.eq.s32.totalorder %s20, 0
    %p89 = por %p87, %p88
    %s91 = sadd.s32 %s90, 1
    %p94 = scmp.eq.s32.totalorder %s14, 1
    %p95 = scmp.ne.s32.totalorder %s90, %s92
    %p96 = scmp.eq.s32.totalorder %s14, 0
    %p97 = por %p95, %p96
    %p98 = scmp.ne.s32.totalorder %s90, %s92
    %p99 = scmp.eq.s32.totalorder %s19, 1
    %p100 = por %p98, %p99
    %p101 = scmp.ne.s32.totalorder %s92, %s93
    %p102 = scmp.eq.s32.totalorder %s19, 0
    %p103 = por %p101, %p102
    %p104 = scmp.ne.s32.totalorder %s92, %s93
    %p105 = scmp.eq.s32.totalorder %s20, 1
    %p106 = por %p104, %p105
    %p108 = scmp.ne.s32.totalorder %s93, %s107
    %p109 = scmp.eq.s32.totalorder %s20, 0
    %p110 = por %p108, %p109
    %s112 = sadd.s32 %s111, 1
    %p115 = scmp.eq.s32.totalorder %s14, 1
    %p116 = scmp.ne.s32.totalorder %s111, %s113
    %p117 = scmp.eq.s32.totalorder %s14, 0
    %p118 = por %p116, %p117
    %p119 = scmp.ne.s32.totalorder %s111, %s113
    %p120 = scmp.eq.s32.totalorder %s19, 1
    %p121 = por %p119, %p120
    %p122 = scmp.ne.s32.totalorder %s113, %s114
    %p123 = scmp.eq.s32.totalorder %s19, 0
    %p124 = por %p122, %p123
    %p125 = scmp.ne.s32.totalorder %s113, %s114
    %p126 = scmp.eq.s32.totalorder %s20, 1
    %p127 = por %p125, %p126
    %p129 = scmp.ne.s32.totalorder %s114, %s128
    %p130 = scmp.eq.s32.totalorder %s20, 0
    %p131 = por %p129, %p130
    %s133 = sadd.s32 %s132, 1
    %p136 = scmp.eq.s32.totalorder %s14, 1
    %p137 = scmp.ne.s32.totalorder %s132, %s134
    %p138 = scmp.eq.s32.totalorder %s14, 0
    %p139 = por %p137, %p138
    %p140 = scmp.ne.s32.totalorder %s132, %s134
    %p141 = scmp.eq.s32.totalorder %s19, 1
    %p142 = por %p140, %p141
    %p143 = scmp.ne.s32.totalorder %s134, %s135
    %p144 = scmp.eq.s32.totalorder %s19, 0
    %p145 = por %p143, %p144
    %p146 = scmp.ne.s32.totalorder %s134, %s135
    %p147 = scmp.eq.s32.totalorder %s20, 1
    %p148 = por %p146, %p147
    %p150 = scmp.ne.s32.totalorder %s135, %s149
    %p151 = scmp.eq.s32.totalorder %s20, 0
    %p152 = por %p150, %p151
    %s153 = ssub.s32 %s14, %s21
    %p154 = scmp.eq.s32.totalorder %s153, 0
    %s156 = sadd.s32 %s155, 1
    %s157 = scalar_select %p154, %s155, %s156
    %p160 = pneg %p154
    %p161 = scmp.eq.s32.totalorder %s14, 1
    %p162 = por %p160, %p161
    %p163 = scmp.ne.s32.totalorder %s155, %s158
    %p164 = scmp.eq.s32.totalorder %s14, 0
    %p165 = por %p163, %p164
    %p166 = scmp.ne.s32.totalorder %s155, %s158
    %p167 = scmp.eq.s32.totalorder %s19, 1
    %p168 = por %p166, %p167
    %p169 = scmp.ne.s32.totalorder %s158, %s159
    %p170 = scmp.eq.s32.totalorder %s19, 0
    %p171 = por %p169, %p170
    %p172 = scmp.ne.s32.totalorder %s158, %s159
    %p173 = scmp.eq.s32.totalorder %s20, 1
    %p174 = por %p172, %p173
    %p176 = scmp.ne.s32.totalorder %s159, %s175
    %p177 = scmp.eq.s32.totalorder %s20, 0
    %p178 = por %p176, %p177
    %s179 = ssub.s32 %s14, %s21
    %p180 = scmp.eq.s32.totalorder %s179, 0
    %s182 = sadd.s32 %s181, 1
    %s183 = scalar_select %p180, %s181, %s182
    %p186 = pneg %p180
    %p187 = scmp.eq.s32.totalorder %s14, 1
    %p188 = por %p186, %p187
    %p189 = scmp.ne.s32.totalorder %s181, %s184
    %p190 = scmp.eq.s32.totalorder %s14, 0
    %p191 = por %p189, %p190
    %p192 = scmp.ne.s32.totalorder %s181, %s184
    %p193 = scmp.eq.s32.totalorder %s19, 1
    %p194 = por %p192, %p193
    %p195 = scmp.ne.s32.totalorder %s184, %s185
    %p196 = scmp.eq.s32.totalorder %s19, 0
    %p197 = por %p195, %p196
    %p198 = scmp.ne.s32.totalorder %s184, %s185
    %p199 = scmp.eq.s32.totalorder %s20, 1
    %p200 = por %p198, %p199
    %p202 = scmp.ne.s32.totalorder %s185, %s201
    %p203 = scmp.eq.s32.totalorder %s20, 0
    %p204 = por %p202, %p203
    %p205 = scmp.le.s32.totalorder 1, %s14
    %p206 = scmp.lt.s32.totalorder %s14, 3
    %p207 = pnand %p205, %p206
    %p208 = pneg %p207
    // Predicated region
    $region9: #{tpu_custom_call.1} parent=5 // pred_check
      _
    $region10: #{tpu_custom_call.1} parent=5 // pred_check_branch
      %210 = sbr.rel (%p207) target = $region12
    $region11: #{tpu_custom_call.1} parent=5 // pred_region
      %s211 = ssub.s32 %s14, 1
      // Predicated region
      $region13: #{tpu_custom_call.1} parent=11 // pred_check
        %p212 = pneg %p61
      $region14: #{tpu_custom_call.1} parent=11 // pred_check_branch
        %214 = sbr.rel (%p212) target = $region16
      $region15: #{tpu_custom_call.1} parent=11 // pred_region
        _
      $region16: #{tpu_custom_call.1} parent=11 // pred_fallthru
        _
      // Predicated region
      $region17: #{tpu_custom_call.1} parent=11 // pred_check
        %p215 = pneg %p82
      $region18: #{tpu_custom_call.1} parent=11 // pred_check_branch
        %217 = sbr.rel (%p215) target = $region20
      $region19: #{tpu_custom_call.1} parent=11 // pred_region
        _
      $region20: #{tpu_custom_call.1} parent=11 // pred_fallthru
        _
      // Predicated region
      $region21: #{tpu_custom_call.1} parent=11 // pred_check
        %p218 = pneg %p103
      $region22: #{tpu_custom_call.1} parent=11 // pred_check_branch
        %220 = sbr.rel (%p218) target = $region24
      $region23: #{tpu_custom_call.1} parent=11 // pred_region
        _
      $region24: #{tpu_custom_call.1} parent=11 // pred_fallthru
        _
      // Predicated region
      $region25: #{tpu_custom_call.1} parent=11 // pred_check
        %p221 = pneg %p124
      $region26: #{tpu_custom_call.1} parent=11 // pred_check_branch
        %223 = sbr.rel (%p221) target = $region28
      $region27: #{tpu_custom_call.1} parent=11 // pred_region
        _
      $region28: #{tpu_custom_call.1} parent=11 // pred_fallthru
        _
      // Predicated region
      $region29: #{tpu_custom_call.1} parent=11 // pred_check
        %p224 = pneg %p145
      $region30: #{tpu_custom_call.1} parent=11 // pred_check_branch
        %226 = sbr.rel (%p224) target = $region32
      $region31: #{tpu_custom_call.1} parent=11 // pred_region
        _
      $region32: #{tpu_custom_call.1} parent=11 // pred_fallthru
        _
    $region12: #{tpu_custom_call.1} parent=5 // pred_fallthru
      _
    %p227 = scmp.lt.s32.totalorder %s14, 2
    // Predicated region
    $region33: #{tpu_custom_call.1} parent=5 // pred_check
      %p228 = pneg %p227
    $region34: #{tpu_custom_call.1} parent=5 // pred_check_branch
      %230 = sbr.rel (%p228) target = $region36
    $region35: #{tpu_custom_call.1} parent=5 // pred_region
      // Predicated region
      $region37: #{tpu_custom_call.1} parent=35 // pred_check
        %p231 = pneg %p34
      $region38: #{tpu_custom_call.1} parent=35 // pred_check_branch
        %233 = sbr.rel (%p231) target = $region40
      $region39: #{tpu_custom_call.1} parent=35 // pred_region
        %s234 = smul.u32 16, %s14
        %p235 = scmp.lt.s32.totalorder %s234, 31
        %s236 = scalar_select %p235, %s234, 31
        %s237 = smul.addr %s236, 8
        %s238 = scalar_lea.vmem %s0, %s237
        %s239 = smul.u32 16, %s14
      $region40: #{tpu_custom_call.1} parent=35 // pred_fallthru
        _
    $region36: #{tpu_custom_call.1} parent=5 // pred_fallthru
      _
    %p240 = scmp.le.s32.totalorder 1, %s14
    %p241 = scmp.lt.s32.totalorder %s14, 3
    %p242 = pnand %p240, %p241
    %p243 = pneg %p242
    // Predicated region
    $region41: #{tpu_custom_call.1} parent=5 // pred_check
      _
    $region42: #{tpu_custom_call.1} parent=5 // pred_check_branch
      %245 = sbr.rel (%p242) target = $region44
    $region43: #{tpu_custom_call.1} parent=5 // pred_region
      %s246 = ssub.s32 %s14, 1
      %s247 = smul.u32 16, %s19
      %p248 = scmp.lt.s32.totalorder %s247, 31
      %s249 = scalar_select %p248, %s247, 31
      %s250 = smul.addr %s249, 8
      %s251 = scalar_lea.vmem %s0, %s250
      %p252 = pneg %p40
      %p253 = pneg %p37
      %p254 = pneg %p61
      %p255 = pneg %p58
      %p256 = pneg %p82
      %p257 = pneg %p79
      %p258 = pneg %p103
      %p259 = pneg %p100
      %p260 = pneg %p124
      %p261 = pneg %p121
      %p262 = pneg %p145
      %p263 = pneg %p142
      %p264 = pneg %p171
      %p265 = pneg %p168
      %s266 = smul.u32 16, %s19
      %p267 = scmp.lt.s32.totalorder %s266, 31
      %s268 = scalar_select %p267, %s266, 31
      %s269 = smul.addr %s268, 4
      %s270 = scalar_lea.vmem %s6, %s269
      %p271 = pneg %p197
      %p272 = pneg %p194
      %s273 = smul.u32 16, %s19
      %p274 = scmp.lt.s32.totalorder %s273, 31
      %s275 = scalar_select %p274, %s273, 31
      %s276 = smul.addr %s275, 4
      %s277 = scalar_lea.vmem %s7, %s276
      %s278 = smul.u32 16, %s19
      %p279 = scmp.lt.s32.totalorder %s278, 31
      %s280 = scalar_select %p279, %s278, 31
      %s281 = smul.addr %s280, 8
      %s282 = scalar_lea.vmem %s0, %s281
      %s283 = smul.u32 16, %s19
      %s284 = smul.u32 16, %s19
      %p285 = scmp.lt.s32.totalorder %s284, 31
      %s286 = scalar_select %p285, %s284, 31
      %s287 = smul.addr %s286, 4
      %s288 = scalar_lea.vmem %s6, %s287
      %s289 = smul.u32 16, %s19
      %s290 = smul.u32 16, %s19
      %p291 = scmp.lt.s32.totalorder %s290, 31
      %s292 = scalar_select %p291, %s290, 31
      %s293 = smul.addr %s292, 4
      %s294 = scalar_lea.vmem %s7, %s293
      %s295 = smul.u32 16, %s19
      %v296 = vld [vmem:[%s282] sm:$0xff]
      %v297 = vld [vmem:[%s282 + $0x8] sm:$0xff]
      %v298 = vld [vmem:[%s282 + $0x10] sm:$0xff]
      %v299 = vld [vmem:[%s282 + $0x18] sm:$0xff]
      %v300 = vld [vmem:[%s282 + $0x20] sm:$0xff]
      %v301 = vld [vmem:[%s282 + $0x28] sm:$0xff]
      %v302 = vld [vmem:[%s282 + $0x30] sm:$0xff]
      %v303 = vld [vmem:[%s282 + $0x38] sm:$0xff]
      %v304 = vld [vmem:[%s282 + $0x40] sm:$0xff]
      %v305 = vld [vmem:[%s282 + $0x48] sm:$0xff]
      %v306 = vld [vmem:[%s282 + $0x50] sm:$0xff]
      %v307 = vld [vmem:[%s282 + $0x58] sm:$0xff]
      %v308 = vld [vmem:[%s282 + $0x60] sm:$0xff]
      %v309 = vld [vmem:[%s282 + $0x68] sm:$0xff]
      %v310 = vld [vmem:[%s282 + $0x70] sm:$0xff]
      %v311 = vld [vmem:[%s282 + $0x78] sm:$0xff]
      %v312 = vld [vmem:[%s1] sm:$0xff]
      %v313 = vld [vmem:[%s1 + $0x8] sm:$0xff]
      %v314 = vld [vmem:[%s2] sm:$0x1]
      %v316 = vlaneseq
      %v317 = vshrl.u32 %v316, 7
      %v318 = vsub.s32 0, %v317
      %v319 = vrot.slane %v314, %v318
      %vm321 = vcmask 130048
      %v323 = vsel %vm321, %v296, 0
      %v326 = vsel %vm321, %v297, 0
      %v329 = vsel %vm321, %v298, 0
      %v332 = vsel %vm321, %v299, 0
      %v335 = vsel %vm321, %v300, 0
      %v338 = vsel %vm321, %v301, 0
      %v341 = vsel %vm321, %v302, 0
      %v344 = vsel %vm321, %v303, 0
      %v347 = vsel %vm321, %v304, 0
      %v350 = vsel %vm321, %v305, 0
      %v353 = vsel %vm321, %v306, 0
      %v356 = vsel %vm321, %v307, 0
      %v359 = vsel %vm321, %v308, 0
      %v362 = vsel %vm321, %v309, 0
      %v365 = vsel %vm321, %v310, 0
      %v368 = vsel %vm321, %v311, 0
      %370 = vmatprep.subr.mxu0 0.0
      %371 = vmatpush1.msra.mxu0 %v312
      %372 = vmatprep.subr.mxu0 0.0
      %373 = vmatpush1.msra.mxu0 %v313
      %374 = vmatprep.subr.mxu0 0.0
      %375 = vmatpush1.msra.mxu0 0.0
      %376 = vmatprep.subr.mxu0 0.0
      %377 = vmatpush1.msra.mxu0 0.0
      %378 = vmatprep.subr.mxu0 0.0
      %379 = vmatpush1.msra.mxu0 0.0
      %380 = vmatprep.subr.mxu0 0.0
      %381 = vmatpush1.msra.mxu0 0.0
      %382 = vmatprep.subr.mxu0 0.0
      %383 = vmatpush1.msra.mxu0 0.0
      %384 = vmatprep.subr.mxu0 0.0
      %385 = vmatpush1.msra.mxu0 0.0
      %386 = vmatprep.subr.mxu0 0.0
      %387 = vmatpush1.msra.mxu0 0.0
      %388 = vmatprep.subr.mxu0 0.0
      %389 = vmatpush1.msra.mxu0 0.0
      %390 = vmatprep.subr.mxu0 0.0
      %391 = vmatpush1.msra.mxu0 0.0
      %392 = vmatprep.subr.mxu0 0.0
      %393 = vmatpush1.msra.mxu0 0.0
      %394 = vmatprep.subr.mxu0 0.0
      %395 = vmatpush1.msra.mxu0 0.0
      %396 = vmatprep.subr.mxu0 0.0
      %397 = vmatpush1.msra.mxu0 0.0
      %398 = vmatprep.subr.mxu0 0.0
      %399 = vmatpush1.msra.mxu0 0.0
      %400 = vmatprep.subr.mxu0 0.0
      %401 = vmatpush1.msra.mxu0 0.0
      %402 = vmatprep.subr.mxu0 0.0
      %403 = vmatpush1.msra.mxu0 0.0
      %404 = vmatprep.subr.mxu0 0.0
      %405 = vmatpush1.msra.mxu0 0.0
      %406 = vmatprep.subr.mxu0 0.0
      %407 = vmatpush1.msra.mxu0 0.0
      %408 = vmatprep.subr.mxu0 0.0
      %409 = vmatpush1.msra.mxu0 0.0
      %410 = vmatprep.subr.mxu0 0.0
      %411 = vmatpush1.msra.mxu0 0.0
      %412 = vmatprep.subr.mxu0 0.0
      %413 = vmatpush1.msra.mxu0 0.0
      %414 = vmatprep.subr.mxu0 0.0
      %415 = vmatpush1.msra.mxu0 0.0
      %416 = vmatprep.subr.mxu0 0.0
      %417 = vmatpush1.msra.mxu0 0.0
      %418 = vmatprep.subr.mxu0 0.0
      %419 = vmatpush1.msra.mxu0 0.0
      %420 = vmatprep.subr.mxu0 0.0
      %421 = vmatpush1.msra.mxu0 0.0
      %422 = vmatprep.subr.mxu0 0.0
      %423 = vmatpush1.msra.mxu0 0.0
      %424 = vmatprep.subr.mxu0 0.0
      %425 = vmatpush1.msra.mxu0 0.0
      %426 = vmatprep.subr.mxu0 0.0
      %427 = vmatpush1.msra.mxu0 0.0
      %428 = vmatprep.subr.mxu0 0.0
      %429 = vmatpush1.msra.mxu0 0.0
      %430 = vmatprep.subr.mxu0 0.0
      %431 = vmatpush1.msra.mxu0 0.0
      %432 = vmatprep.subr.mxu0 0.0
      %433 = vmatpush1.msra.mxu0 0.0
      %434 = vmatprep.mubr.f32.mxu0 0.0
      %435 = vmatmul.mubr.f32.gmra.mrb[0].mxu0 %v323
      %v436 = vpop.f32.mrb[0].mxu0
      %v437 = vadd.f32 %v319, %v436
      %v438 = vpop.f32.mrb[0].mxu0
      %439 = vmatprep.mubr.f32.mxu0 0.0
      %440 = vmatmul.mubr.f32.gmra.mrb[0].mxu0 %v326
      %v441 = vpop.f32.mrb[0].mxu0
      %v442 = vadd.f32 %v319, %v441
      %v443 = vpop.f32.mrb[0].mxu0
      %444 = vmatprep.mubr.f32.mxu0 0.0
      %445 = vmatmul.mubr.f32.gmra.mrb[0].mxu0 %v329
      %v446 = vpop.f32.mrb[0].mxu0
      %v447 = vadd.f32 %v319, %v446
      %v448 = vpop.f32.mrb[0].mxu0
      %449 = vmatprep.mubr.f32.mxu0 0.0
      %450 = vmatmul.mubr.f32.gmra.mrb[0].mxu0 %v332
      %v451 = vpop.f32.mrb[0].mxu0
      %v452 = vadd.f32 %v319, %v451
      %v453 = vpop.f32.mrb[0].mxu0
      %454 = vmatprep.mubr.f32.mxu0 0.0
      %455 = vmatmul.mubr.f32.gmra.mrb[0].mxu0 %v335
      %v456 = vpop.f32.mrb[0].mxu0
      %v457 = vadd.f32 %v319, %v456
      %v458 = vpop.f32.mrb[0].mxu0
      %459 = vmatprep.mubr.f32.mxu0 0.0
      %460 = vmatmul.mubr.f32.gmra.mrb[0].mxu0 %v338
      %v461 = vpop.f32.mrb[0].mxu0
      %v462 = vadd.f32 %v319, %v461
      %v463 = vpop.f32.mrb[0].mxu0
      %464 = vmatprep.mubr.f32.mxu0 0.0
      %465 = vmatmul.mubr.f32.gmra.mrb[0].mxu0 %v341
      %v466 = vpop.f32.mrb[0].mxu0
      %v467 = vadd.f32 %v319, %v466
      %v468 = vpop.f32.mrb[0].mxu0
      %469 = vmatprep.mubr.f32.mxu0 0.0
      %470 = vmatmul.mubr.f32.gmra.mrb[0].mxu0 %v344
      %v471 = vpop.f32.mrb[0].mxu0
      %v472 = vadd.f32 %v319, %v471
      %v473 = vpop.f32.mrb[0].mxu0
      %474 = vmatprep.mubr.f32.mxu0 0.0
      %475 = vmatmul.mubr.f32.gmra.mrb[0].mxu0 %v347
      %v476 = vpop.f32.mrb[0].mxu0
      %v477 = vadd.f32 %v319, %v476
      %v478 = vpop.f32.mrb[0].mxu0
      %479 = vmatprep.mubr.f32.mxu0 0.0
      %480 = vmatmul.mubr.f32.gmra.mrb[0].mxu0 %v350
      %v481 = vpop.f32.mrb[0].mxu0
      %v482 = vadd.f32 %v319, %v481
      %v483 = vpop.f32.mrb[0].mxu0
      %484 = vmatprep.mubr.f32.mxu0 0.0
      %485 = vmatmul.mubr.f32.gmra.mrb[0].mxu0 %v353
      %v486 = vpop.f32.mrb[0].mxu0
      %v487 = vadd.f32 %v319, %v486
      %v488 = vpop.f32.mrb[0].mxu0
      %489 = vmatprep.mubr.f32.mxu0 0.0
      %490 = vmatmul.mubr.f32.gmra.mrb[0].mxu0 %v356
      %v491 = vpop.f32.mrb[0].mxu0
      %v492 = vadd.f32 %v319, %v491
      %v493 = vpop.f32.mrb[0].mxu0
      %494 = vmatprep.mubr.f32.mxu0 0.0
      %495 = vmatmul.mubr.f32.gmra.mrb[0].mxu0 %v359
      %v496 = vpop.f32.mrb[0].mxu0
      %v497 = vadd.f32 %v319, %v496
      %v498 = vpop.f32.mrb[0].mxu0
      %499 = vmatprep.mubr.f32.mxu0 0.0
      %500 = vmatmul.mubr.f32.gmra.mrb[0].mxu0 %v362
      %v501 = vpop.f32.mrb[0].mxu0
      %v502 = vadd.f32 %v319, %v501
      %v503 = vpop.f32.mrb[0].mxu0
      %504 = vmatprep.mubr.f32.mxu0 0.0
      %505 = vmatmul.mubr.f32.gmra.mrb[0].mxu0 %v365
      %v506 = vpop.f32.mrb[0].mxu0
      %v507 = vadd.f32 %v319, %v506
      %v508 = vpop.f32.mrb[0].mxu0
      %509 = vmatprep.mubr.f32.mxu0 0.0
      %510 = vmatmul.mubr.f32.gmra.mrb[0].mxu0 %v368
      %v511 = vpop.f32.mrb[0].mxu0
      %v512 = vadd.f32 %v319, %v511
      %v513 = vpop.f32.mrb[0].mxu0
      %514 = vdwg.mxu0
      %v515 = vtanh.pop %v437
      %v516 = vtanh.pop %v442
      %v517 = vtanh.pop %v447
      %v518 = vtanh.pop %v452
      %v519 = vtanh.pop %v457
      %v520 = vtanh.pop %v462
      %v521 = vtanh.pop %v467
      %v522 = vtanh.pop %v472
      %v523 = vtanh.pop %v477
      %v524 = vtanh.pop %v482
      %v525 = vtanh.pop %v487
      %v526 = vtanh.pop %v492
      %v527 = vtanh.pop %v497
      %v528 = vtanh.pop %v502
      %v529 = vtanh.pop %v507
      %v530 = vtanh.pop %v512
      %v531 = vld [vmem:[%s3] sm:$0xff]
      %v532 = vld [vmem:[%s3 + $0x8] sm:$0xff]
      %v533 = vld [vmem:[%s3 + $0x10] sm:$0xff]
      %v534 = vld [vmem:[%s3 + $0x18] sm:$0xff]
      %v535 = vld [vmem:[%s4] sm:$0x1]
      %v537 = vlaneseq
      %v538 = vshrl.u32 %v537, 7
      %v539 = vsub.s32 0, %v538
      %v540 = vrot.slane %v535, %v539
      %vm542 = vcmask 261120
      %v544 = vsel %vm542, %v515, 0
      %v547 = vsel %vm542, %v516, 0
      %v550 = vsel %vm542, %v517, 0
      %v553 = vsel %vm542, %v518, 0
      %v556 = vsel %vm542, %v519, 0
      %v559 = vsel %vm542, %v520, 0
      %v562 = vsel %vm542, %v521, 0
      %v565 = vsel %vm542, %v522, 0
      %v568 = vsel %vm542, %v523, 0
      %v571 = vsel %vm542, %v524, 0
      %v574 = vsel %vm542, %v525, 0
      %v577 = vsel %vm542, %v526, 0
      %v580 = vsel %vm542, %v527, 0
      %v583 = vsel %vm542, %v528, 0
      %v586 = vsel %vm542, %v529, 0
      %v589 = vsel %vm542, %v530, 0
      %591 = vmatprep.subr.mxu0 0.0
      %592 = vmatpush1.msra.mxu0 %v531
      %593 = vmatprep.subr.mxu0 0.0
      %594 = vmatpush1.msra.mxu0 %v532
      %595 = vmatprep.subr.mxu0 0.0
      %596 = vmatpush1.msra.mxu0 %v533
      %597 = vmatprep.subr.mxu0 0.0
      %598 = vmatpush1.msra.mxu0 %v534
      %599 = vmatprep.subr.mxu0 0.0
      %600 = vmatpush1.msra.mxu0 0.0
      %601 = vmatprep.subr.mxu0 0.0
      %602 = vmatpush1.msra.mxu0 0.0
      %603 = vmatprep.subr.mxu0 0.0
      %604 = vmatpush1.msra.mxu0 0.0
      %605 = vmatprep.subr.mxu0 0.0
      %606 = vmatpush1.msra.mxu0 0.0
      %607 = vmatprep.subr.mxu0 0.0
      %608 = vmatpush1.msra.mxu0 0.0
      %609 = vmatprep.subr.mxu0 0.0
      %610 = vmatpush1.msra.mxu0 0.0
      %611 = vmatprep.subr.mxu0 0.0
      %612 = vmatpush1.msra.mxu0 0.0
      %613 = vmatprep.subr.mxu0 0.0
      %614 = vmatpush1.msra.mxu0 0.0
      %615 = vmatprep.subr.mxu0 0.0
      %616 = vmatpush1.msra.mxu0 0.0
      %617 = vmatprep.subr.mxu0 0.0
      %618 = vmatpush1.msra.mxu0 0.0
      %619 = vmatprep.subr.mxu0 0.0
      %620 = vmatpush1.msra.mxu0 0.0
      %621 = vmatprep.subr.mxu0 0.0
      %622 = vmatpush1.msra.mxu0 0.0
      %623 = vmatprep.subr.mxu0 0.0
      %624 = vmatpush1.msra.mxu0 0.0
      %625 = vmatprep.subr.mxu0 0.0
      %626 = vmatpush1.msra.mxu0 0.0
      %627 = vmatprep.subr.mxu0 0.0
      %628 = vmatpush1.msra.mxu0 0.0
      %629 = vmatprep.subr.mxu0 0.0
      %630 = vmatpush1.msra.mxu0 0.0
      %631 = vmatprep.subr.mxu0 0.0
      %632 = vmatpush1.msra.mxu0 0.0
      %633 = vmatprep.subr.mxu0 0.0
      %634 = vmatpush1.msra.mxu0 0.0
      %635 = vmatprep.subr.mxu0 0.0
      %636 = vmatpush1.msra.mxu0 0.0
      %637 = vmatprep.subr.mxu0 0.0
      %638 = vmatpush1.msra.mxu0 0.0
      %639 = vmatprep.subr.mxu0 0.0
      %640 = vmatpush1.msra.mxu0 0.0
      %641 = vmatprep.subr.mxu0 0.0
      %642 = vmatpush1.msra.mxu0 0.0
      %643 = vmatprep.subr.mxu0 0.0
      %644 = vmatpush1.msra.mxu0 0.0
      %645 = vmatprep.subr.mxu0 0.0
      %646 = vmatpush1.msra.mxu0 0.0
      %647 = vmatprep.subr.mxu0 0.0
      %648 = vmatpush1.msra.mxu0 0.0
      %649 = vmatprep.subr.mxu0 0.0
      %650 = vmatpush1.msra.mxu0 0.0
      %651 = vmatprep.subr.mxu0 0.0
      %652 = vmatpush1.msra.mxu0 0.0
      %653 = vmatprep.subr.mxu0 0.0
      %654 = vmatpush1.msra.mxu0 0.0
      %655 = vmatprep.mubr.f32.mxu0 0.0
      %656 = vmatmul.mubr.f32.gmra.mrb[0].mxu0 %v544
      %v657 = vpop.f32.mrb[0].mxu0
      %v658 = vadd.f32 %v540, %v657
      %v659 = vpop.f32.mrb[0].mxu0
      %660 = vmatprep.mubr.f32.mxu0 0.0
      %661 = vmatmul.mubr.f32.gmra.mrb[0].mxu0 %v547
      %v662 = vpop.f32.mrb[0].mxu0
      %v663 = vadd.f32 %v540, %v662
      %v664 = vpop.f32.mrb[0].mxu0
      %665 = vmatprep.mubr.f32.mxu0 0.0
      %666 = vmatmul.mubr.f32.gmra.mrb[0].mxu0 %v550
      %v667 = vpop.f32.mrb[0].mxu0
      %v668 = vadd.f32 %v540, %v667
      %v669 = vpop.f32.mrb[0].mxu0
      %670 = vmatprep.mubr.f32.mxu0 0.0
      %671 = vmatmul.mubr.f32.gmra.mrb[0].mxu0 %v553
      %v672 = vpop.f32.mrb[0].mxu0
      %v673 = vadd.f32 %v540, %v672
      %v674 = vpop.f32.mrb[0].mxu0
      %675 = vmatprep.mubr.f32.mxu0 0.0
      %676 = vmatmul.mubr.f32.gmra.mrb[0].mxu0 %v556
      %v677 = vpop.f32.mrb[0].mxu0
      %v678 = vadd.f32 %v540, %v677
      %v679 = vpop.f32.mrb[0].mxu0
      %680 = vmatprep.mubr.f32.mxu0 0.0
      %681 = vmatmul.mubr.f32.gmra.mrb[0].mxu0 %v559
      %v682 = vpop.f32.mrb[0].mxu0
      %v683 = vadd.f32 %v540, %v682
      %v684 = vpop.f32.mrb[0].mxu0
      %685 = vmatprep.mubr.f32.mxu0 0.0
      %686 = vmatmul.mubr.f32.gmra.mrb[0].mxu0 %v562
      %v687 = vpop.f32.mrb[0].mxu0
      %v688 = vadd.f32 %v540, %v687
      %v689 = vpop.f32.mrb[0].mxu0
      %690 = vmatprep.mubr.f32.mxu0 0.0
      %691 = vmatmul.mubr.f32.gmra.mrb[0].mxu0 %v565
      %v692 = vpop.f32.mrb[0].mxu0
      %v693 = vadd.f32 %v540, %v692
      %v694 = vpop.f32.mrb[0].mxu0
      %695 = vmatprep.mubr.f32.mxu0 0.0
      %696 = vmatmul.mubr.f32.gmra.mrb[0].mxu0 %v568
      %v697 = vpop.f32.mrb[0].mxu0
      %v698 = vadd.f32 %v540, %v697
      %v699 = vpop.f32.mrb[0].mxu0
      %700 = vmatprep.mubr.f32.mxu0 0.0
      %701 = vmatmul.mubr.f32.gmra.mrb[0].mxu0 %v571
      %v702 = vpop.f32.mrb[0].mxu0
      %v703 = vadd.f32 %v540, %v702
      %v704 = vpop.f32.mrb[0].mxu0
      %705 = vmatprep.mubr.f32.mxu0 0.0
      %706 = vmatmul.mubr.f32.gmra.mrb[0].mxu0 %v574
      %v707 = vpop.f32.mrb[0].mxu0
      %v708 = vadd.f32 %v540, %v707
      %v709 = vpop.f32.mrb[0].mxu0
      %710 = vmatprep.mubr.f32.mxu0 0.0
      %711 = vmatmul.mubr.f32.gmra.mrb[0].mxu0 %v577
      %v712 = vpop.f32.mrb[0].mxu0
      %v713 = vadd.f32 %v540, %v712
      %v714 = vpop.f32.mrb[0].mxu0
      %715 = vmatprep.mubr.f32.mxu0 0.0
      %716 = vmatmul.mubr.f32.gmra.mrb[0].mxu0 %v580
      %v717 = vpop.f32.mrb[0].mxu0
      %v718 = vadd.f32 %v540, %v717
      %v719 = vpop.f32.mrb[0].mxu0
      %720 = vmatprep.mubr.f32.mxu0 0.0
      %721 = vmatmul.mubr.f32.gmra.mrb[0].mxu0 %v583
      %v722 = vpop.f32.mrb[0].mxu0
      %v723 = vadd.f32 %v540, %v722
      %v724 = vpop.f32.mrb[0].mxu0
      %725 = vmatprep.mubr.f32.mxu0 0.0
      %726 = vmatmul.mubr.f32.gmra.mrb[0].mxu0 %v586
      %v727 = vpop.f32.mrb[0].mxu0
      %v728 = vadd.f32 %v540, %v727
      %v729 = vpop.f32.mrb[0].mxu0
      %730 = vmatprep.mubr.f32.mxu0 0.0
      %731 = vmatmul.mubr.f32.gmra.mrb[0].mxu0 %v589
      %v732 = vpop.f32.mrb[0].mxu0
      %v733 = vadd.f32 %v540, %v732
      %v734 = vpop.f32.mrb[0].mxu0
      %735 = vdwg.mxu0
      %v736 = vtanh.pop %v658
      %v737 = vtanh.pop %v663
      %v738 = vtanh.pop %v668
      %v739 = vtanh.pop %v673
      %v740 = vtanh.pop %v678
      %v741 = vtanh.pop %v683
      %v742 = vtanh.pop %v688
      %v743 = vtanh.pop %v693
      %v744 = vtanh.pop %v698
      %v745 = vtanh.pop %v703
      %v746 = vtanh.pop %v708
      %v747 = vtanh.pop %v713
      %v748 = vtanh.pop %v718
      %v749 = vtanh.pop %v723
      %v750 = vtanh.pop %v728
      %v751 = vtanh.pop %v733
      %v752 = vld [vmem:[%s5] sm:$0xff]
      %v753 = vld [vmem:[%s5 + $0x8] sm:$0xff]
      %v755 = vsel %vm321, %v736, 0
      %v758 = vsel %vm321, %v737, 0
      %v761 = vsel %vm321, %v738, 0
      %v764 = vsel %vm321, %v739, 0
      %v767 = vsel %vm321, %v740, 0
      %v770 = vsel %vm321, %v741, 0
      %v773 = vsel %vm321, %v742, 0
      %v776 = vsel %vm321, %v743, 0
      %v779 = vsel %vm321, %v744, 0
      %v782 = vsel %vm321, %v745, 0
      %v785 = vsel %vm321, %v746, 0
      %v788 = vsel %vm321, %v747, 0
      %v791 = vsel %vm321, %v748, 0
      %v794 = vsel %vm321, %v749, 0
      %v797 = vsel %vm321, %v750, 0
      %v800 = vsel %vm321, %v751, 0
      %802 = vmatprep.subr.mxu0 0.0
      %803 = vmatpush1.msra.mxu0 %v752
      %804 = vmatprep.subr.mxu0 0.0
      %805 = vmatpush1.msra.mxu0 %v753
      %806 = vmatprep.subr.mxu0 0.0
      %807 = vmatpush1.msra.mxu0 0.0
      %808 = vmatprep.subr.mxu0 0.0
      %809 = vmatpush1.msra.mxu0 0.0
      %810 = vmatprep.subr.mxu0 0.0
      %811 = vmatpush1.msra.mxu0 0.0
      %812 = vmatprep.subr.mxu0 0.0
      %813 = vmatpush1.msra.mxu0 0.0
      %814 = vmatprep.subr.mxu0 0.0
      %815 = vmatpush1.msra.mxu0 0.0
      %816 = vmatprep.subr.mxu0 0.0
      %817 = vmatpush1.msra.mxu0 0.0
      %818 = vmatprep.subr.mxu0 0.0
      %819 = vmatpush1.msra.mxu0 0.0
      %820 = vmatprep.subr.mxu0 0.0
      %821 = vmatpush1.msra.mxu0 0.0
      %822 = vmatprep.subr.mxu0 0.0
      %823 = vmatpush1.msra.mxu0 0.0
      %824 = vmatprep.subr.mxu0 0.0
      %825 = vmatpush1.msra.mxu0 0.0
      %826 = vmatprep.subr.mxu0 0.0
      %827 = vmatpush1.msra.mxu0 0.0
      %828 = vmatprep.subr.mxu0 0.0
      %829 = vmatpush1.msra.mxu0 0.0
      %830 = vmatprep.subr.mxu0 0.0
      %831 = vmatpush1.msra.mxu0 0.0
      %832 = vmatprep.subr.mxu0 0.0
      %833 = vmatpush1.msra.mxu0 0.0
      %834 = vmatprep.subr.mxu0 0.0
      %835 = vmatpush1.msra.mxu0 0.0
      %836 = vmatprep.subr.mxu0 0.0
      %837 = vmatpush1.msra.mxu0 0.0
      %838 = vmatprep.subr.mxu0 0.0
      %839 = vmatpush1.msra.mxu0 0.0
      %840 = vmatprep.subr.mxu0 0.0
      %841 = vmatpush1.msra.mxu0 0.0
      %842 = vmatprep.subr.mxu0 0.0
      %843 = vmatpush1.msra.mxu0 0.0
      %844 = vmatprep.subr.mxu0 0.0
      %845 = vmatpush1.msra.mxu0 0.0
      %846 = vmatprep.subr.mxu0 0.0
      %847 = vmatpush1.msra.mxu0 0.0
      %848 = vmatprep.subr.mxu0 0.0
      %849 = vmatpush1.msra.mxu0 0.0
      %850 = vmatprep.subr.mxu0 0.0
      %851 = vmatpush1.msra.mxu0 0.0
      %852 = vmatprep.subr.mxu0 0.0
      %853 = vmatpush1.msra.mxu0 0.0
      %854 = vmatprep.subr.mxu0 0.0
      %855 = vmatpush1.msra.mxu0 0.0
      %856 = vmatprep.subr.mxu0 0.0
      %857 = vmatpush1.msra.mxu0 0.0
      %858 = vmatprep.subr.mxu0 0.0
      %859 = vmatpush1.msra.mxu0 0.0
      %860 = vmatprep.subr.mxu0 0.0
      %861 = vmatpush1.msra.mxu0 0.0
      %862 = vmatprep.subr.mxu0 0.0
      %863 = vmatpush1.msra.mxu0 0.0
      %864 = vmatprep.subr.mxu0 0.0
      %865 = vmatpush1.msra.mxu0 0.0
      %866 = vmatprep.mubr.f32.mxu0 0.0
      %867 = vmatmul.mubr.f32.gmra.mrb[0].mxu0 %v755
      %v868 = vpop.f32.mrb[0].mxu0
      %v869 = vadd.f32 0.0, %v868
      %v870 = vpop.f32.mrb[0].mxu0
      %871 = vmatprep.mubr.f32.mxu0 0.0
      %872 = vmatmul.mubr.f32.gmra.mrb[0].mxu0 %v758
      %v873 = vpop.f32.mrb[0].mxu0
      %v874 = vadd.f32 0.0, %v873
      %v875 = vpop.f32.mrb[0].mxu0
      %876 = vmatprep.mubr.f32.mxu0 0.0
      %877 = vmatmul.mubr.f32.gmra.mrb[0].mxu0 %v761
      %v878 = vpop.f32.mrb[0].mxu0
      %v879 = vadd.f32 0.0, %v878
      %v880 = vpop.f32.mrb[0].mxu0
      %881 = vmatprep.mubr.f32.mxu0 0.0
      %882 = vmatmul.mubr.f32.gmra.mrb[0].mxu0 %v764
      %v883 = vpop.f32.mrb[0].mxu0
      %v884 = vadd.f32 0.0, %v883
      %v885 = vpop.f32.mrb[0].mxu0
      %886 = vmatprep.mubr.f32.mxu0 0.0
      %887 = vmatmul.mubr.f32.gmra.mrb[0].mxu0 %v767
      %v888 = vpop.f32.mrb[0].mxu0
      %v889 = vadd.f32 0.0, %v888
      %v890 = vpop.f32.mrb[0].mxu0
      %891 = vmatprep.mubr.f32.mxu0 0.0
      %892 = vmatmul.mubr.f32.gmra.mrb[0].mxu0 %v770
      %v893 = vpop.f32.mrb[0].mxu0
      %v894 = vadd.f32 0.0, %v893
      %v895 = vpop.f32.mrb[0].mxu0
      %896 = vmatprep.mubr.f32.mxu0 0.0
      %897 = vmatmul.mubr.f32.gmra.mrb[0].mxu0 %v773
      %v898 = vpop.f32.mrb[0].mxu0
      %v899 = vadd.f32 0.0, %v898
      %v900 = vpop.f32.mrb[0].mxu0
      %901 = vmatprep.mubr.f32.mxu0 0.0
      %902 = vmatmul.mubr.f32.gmra.mrb[0].mxu0 %v776
      %v903 = vpop.f32.mrb[0].mxu0
      %v904 = vadd.f32 0.0, %v903
      %v905 = vpop.f32.mrb[0].mxu0
      %906 = vmatprep.mubr.f32.mxu0 0.0
      %907 = vmatmul.mubr.f32.gmra.mrb[0].mxu0 %v779
      %v908 = vpop.f32.mrb[0].mxu0
      %v909 = vadd.f32 0.0, %v908
      %v910 = vpop.f32.mrb[0].mxu0
      %911 = vmatprep.mubr.f32.mxu0 0.0
      %912 = vmatmul.mubr.f32.gmra.mrb[0].mxu0 %v782
      %v913 = vpop.f32.mrb[0].mxu0
      %v914 = vadd.f32 0.0, %v913
      %v915 = vpop.f32.mrb[0].mxu0
      %916 = vmatprep.mubr.f32.mxu0 0.0
      %917 = vmatmul.mubr.f32.gmra.mrb[0].mxu0 %v785
      %v918 = vpop.f32.mrb[0].mxu0
      %v919 = vadd.f32 0.0, %v918
      %v920 = vpop.f32.mrb[0].mxu0
      %921 = vmatprep.mubr.f32.mxu0 0.0
      %922 = vmatmul.mubr.f32.gmra.mrb[0].mxu0 %v788
      %v923 = vpop.f32.mrb[0].mxu0
      %v924 = vadd.f32 0.0, %v923
      %v925 = vpop.f32.mrb[0].mxu0
      %926 = vmatprep.mubr.f32.mxu0 0.0
      %927 = vmatmul.mubr.f32.gmra.mrb[0].mxu0 %v791
      %v928 = vpop.f32.mrb[0].mxu0
      %v929 = vadd.f32 0.0, %v928
      %v930 = vpop.f32.mrb[0].mxu0
      %931 = vmatprep.mubr.f32.mxu0 0.0
      %932 = vmatmul.mubr.f32.gmra.mrb[0].mxu0 %v794
      %v933 = vpop.f32.mrb[0].mxu0
      %v934 = vadd.f32 0.0, %v933
      %v935 = vpop.f32.mrb[0].mxu0
      %936 = vmatprep.mubr.f32.mxu0 0.0
      %937 = vmatmul.mubr.f32.gmra.mrb[0].mxu0 %v797
      %v938 = vpop.f32.mrb[0].mxu0
      %v939 = vadd.f32 0.0, %v938
      %v940 = vpop.f32.mrb[0].mxu0
      %941 = vmatprep.mubr.f32.mxu0 0.0
      %942 = vmatmul.mubr.f32.gmra.mrb[0].mxu0 %v800
      %v943 = vpop.f32.mrb[0].mxu0
      %v944 = vadd.f32 0.0, %v943
      %v945 = vpop.f32.mrb[0].mxu0
      %946 = vdwg.mxu0
      %s947 = scalar_lea.vmem %s1, 16
      %v948 = vld [vmem:[%s947] sm:$0xff]
      %v949 = vld [vmem:[%s947 + $0x8] sm:$0xff]
      %s950 = scalar_lea.vmem %s2, 1
      %v951 = vld [vmem:[%s950] sm:$0x1]
      %v953 = vlaneseq
      %v954 = vshrl.u32 %v953, 7
      %v955 = vsub.s32 0, %v954
      %v956 = vrot.slane %v951, %v955
      %958 = vmatprep.subr.mxu0 0.0
      %959 = vmatpush1.msra.mxu0 %v948
      %960 = vmatprep.subr.mxu0 0.0
      %961 = vmatpush1.msra.mxu0 %v949
      %962 = vmatprep.subr.mxu0 0.0
      %963 = vmatpush1.msra.mxu0 0.0
      %964 = vmatprep.subr.mxu0 0.0
      %965 = vmatpush1.msra.mxu0 0.0
      %966 = vmatprep.subr.mxu0 0.0
      %967 = vmatpush1.msra.mxu0 0.0
      %968 = vmatprep.subr.mxu0 0.0
      %969 = vmatpush1.msra.mxu0 0.0
      %970 = vmatprep.subr.mxu0 0.0
      %971 = vmatpush1.msra.mxu0 0.0
      %972 = vmatprep.subr.mxu0 0.0
      %973 = vmatpush1.msra.mxu0 0.0
      %974 = vmatprep.subr.mxu0 0.0
      %975 = vmatpush1.msra.mxu0 0.0
      %976 = vmatprep.subr.mxu0 0.0
      %977 = vmatpush1.msra.mxu0 0.0
      %978 = vmatprep.subr.mxu0 0.0
      %979 = vmatpush1.msra.mxu0 0.0
      %980 = vmatprep.subr.mxu0 0.0
      %981 = vmatpush1.msra.mxu0 0.0
      %982 = vmatprep.subr.mxu0 0.0
      %983 = vmatpush1.msra.mxu0 0.0
      %984 = vmatprep.subr.mxu0 0.0
      %985 = vmatpush1.msra.mxu0 0.0
      %986 = vmatprep.subr.mxu0 0.0
      %987 = vmatpush1.msra.mxu0 0.0
      %988 = vmatprep.subr.mxu0 0.0
      %989 = vmatpush1.msra.mxu0 0.0
      %990 = vmatprep.subr.mxu0 0.0
      %991 = vmatpush1.msra.mxu0 0.0
      %992 = vmatprep.subr.mxu0 0.0
      %993 = vmatpush1.msra.mxu0 0.0
      %994 = vmatprep.subr.mxu0 0.0
      %995 = vmatpush1.msra.mxu0 0.0
      %996 = vmatprep.subr.mxu0 0.0
      %997 = vmatpush1.msra.mxu0 0.0
      %998 = vmatprep.subr.mxu0 0.0
      %999 = vmatpush1.msra.mxu0 0.0
      %1000 = vmatprep.subr.mxu0 0.0
      %1001 = vmatpush1.msra.mxu0 0.0
      %1002 = vmatprep.subr.mxu0 0.0
      %1003 = vmatpush1.msra.mxu0 0.0
      %1004 = vmatprep.subr.mxu0 0.0
      %1005 = vmatpush1.msra.mxu0 0.0
      %1006 = vmatprep.subr.mxu0 0.0
      %1007 = vmatpush1.msra.mxu0 0.0
      %1008 = vmatprep.subr.mxu0 0.0
      %1009 = vmatpush1.msra.mxu0 0.0
      %1010 = vmatprep.subr.mxu0 0.0
      %1011 = vmatpush1.msra.mxu0 0.0
      %1012 = vmatprep.subr.mxu0 0.0
      %1013 = vmatpush1.msra.mxu0 0.0
      %1014 = vmatprep.subr.mxu0 0.0
      %1015 = vmatpush1.msra.mxu0 0.0
      %1016 = vmatprep.subr.mxu0 0.0
      %1017 = vmatpush1.msra.mxu0 0.0
      %1018 = vmatprep.subr.mxu0 0.0
      %1019 = vmatpush1.msra.mxu0 0.0
      %1020 = vmatprep.subr.mxu0 0.0
      %1021 = vmatpush1.msra.mxu0 0.0
      %1022 = vmatprep.mubr.f32.mxu0 0.0
      %1023 = vmatmul.mubr.f32.gmra.mrb[0].mxu0 %v323
      %v1024 = vpop.f32.mrb[0].mxu0
      %v1025 = vadd.f32 %v956, %v1024
      %v1026 = vpop.f32.mrb[0].mxu0
      %1027 = vmatprep.mubr.f32.mxu0 0.0
      %1028 = vmatmul.mubr.f32.gmra.mrb[0].mxu0 %v326
      %v1029 = vpop.f32.mrb[0].mxu0
      %v1030 = vadd.f32 %v956, %v1029
      %v1031 = vpop.f32.mrb[0].mxu0
      %1032 = vmatprep.mubr.f32.mxu0 0.0
      %1033 = vmatmul.mubr.f32.gmra.mrb[0].mxu0 %v329
      %v1034 = vpop.f32.mrb[0].mxu0
      %v1035 = vadd.f32 %v956, %v1034
      %v1036 = vpop.f32.mrb[0].mxu0
      %1037 = vmatprep.mubr.f32.mxu0 0.0
      %1038 = vmatmul.mubr.f32.gmra.mrb[0].mxu0 %v332
      %v1039 = vpop.f32.mrb[0].mxu0
      %v1040 = vadd.f32 %v956, %v1039
      %v1041 = vpop.f32.mrb[0].mxu0
      %1042 = vmatprep.mubr.f32.mxu0 0.0
      %1043 = vmatmul.mubr.f32.gmra.mrb[0].mxu0 %v335
      %v1044 = vpop.f32.mrb[0].mxu0
      %v1045 = vadd.f32 %v956, %v1044
      %v1046 = vpop.f32.mrb[0].mxu0
      %1047 = vmatprep.mubr.f32.mxu0 0.0
      %1048 = vmatmul.mubr.f32.gmra.mrb[0].mxu0 %v338
      %v1049 = vpop.f32.mrb[0].mxu0
      %v1050 = vadd.f32 %v956, %v1049
      %v1051 = vpop.f32.mrb[0].mxu0
      %1052 = vmatprep.mubr.f32.mxu0 0.0
      %1053 = vmatmul.mubr.f32.gmra.mrb[0].mxu0 %v341
      %v1054 = vpop.f32.mrb[0].mxu0
      %v1055 = vadd.f32 %v956, %v1054
      %v1056 = vpop.f32.mrb[0].mxu0
      %1057 = vmatprep.mubr.f32.mxu0 0.0
      %1058 = vmatmul.mubr.f32.gmra.mrb[0].mxu0 %v344
      %v1059 = vpop.f32.mrb[0].mxu0
      %v1060 = vadd.f32 %v956, %v1059
      %v1061 = vpop.f32.mrb[0].mxu0
      %1062 = vmatprep.mubr.f32.mxu0 0.0
      %1063 = vmatmul.mubr.f32.gmra.mrb[0].mxu0 %v347
      %v1064 = vpop.f32.mrb[0].mxu0
      %v1065 = vadd.f32 %v956, %v1064
      %v1066 = vpop.f32.mrb[0].mxu0
      %1067 = vmatprep.mubr.f32.mxu0 0.0
      %1068 = vmatmul.mubr.f32.gmra.mrb[0].mxu0 %v350
      %v1069 = vpop.f32.mrb[0].mxu0
      %v1070 = vadd.f32 %v956, %v1069
      %v1071 = vpop.f32.mrb[0].mxu0
      %1072 = vmatprep.mubr.f32.mxu0 0.0
      %1073 = vmatmul.mubr.f32.gmra.mrb[0].mxu0 %v353
      %v1074 = vpop.f32.mrb[0].mxu0
      %v1075 = vadd.f32 %v956, %v1074
      %v1076 = vpop.f32.mrb[0].mxu0
      %1077 = vmatprep.mubr.f32.mxu0 0.0
      %1078 = vmatmul.mubr.f32.gmra.mrb[0].mxu0 %v356
      %v1079 = vpop.f32.mrb[0].mxu0
      %v1080 = vadd.f32 %v956, %v1079
      %v1081 = vpop.f32.mrb[0].mxu0
      %1082 = vmatprep.mubr.f32.mxu0 0.0
      %1083 = vmatmul.mubr.f32.gmra.mrb[0].mxu0 %v359
      %v1084 = vpop.f32.mrb[0].mxu0
      %v1085 = vadd.f32 %v956, %v1084
      %v1086 = vpop.f32.mrb[0].mxu0
      %1087 = vmatprep.mubr.f32.mxu0 0.0
      %1088 = vmatmul.mubr.f32.gmra.mrb[0].mxu0 %v362
      %v1089 = vpop.f32.mrb[0].mxu0
      %v1090 = vadd.f32 %v956, %v1089
      %v1091 = vpop.f32.mrb[0].mxu0
      %1092 = vmatprep.mubr.f32.mxu0 0.0
      %1093 = vmatmul.mubr.f32.gmra.mrb[0].mxu0 %v365
      %v1094 = vpop.f32.mrb[0].mxu0
      %v1095 = vadd.f32 %v956, %v1094
      %v1096 = vpop.f32.mrb[0].mxu0
      %1097 = vmatprep.mubr.f32.mxu0 0.0
      %1098 = vmatmul.mubr.f32.gmra.mrb[0].mxu0 %v368
      %v1099 = vpop.f32.mrb[0].mxu0
      %v1100 = vadd.f32 %v956, %v1099
      %v1101 = vpop.f32.mrb[0].mxu0
      %1102 = vdwg.mxu0
      %v1103 = vtanh.pop %v1025
      %v1104 = vtanh.pop %v1030
      %v1105 = vtanh.pop %v1035
      %v1106 = vtanh.pop %v1040
      %v1107 = vtanh.pop %v1045
      %v1108 = vtanh.pop %v1050
      %v1109 = vtanh.pop %v1055
      %v1110 = vtanh.pop %v1060
      %v1111 = vtanh.pop %v1065
      %v1112 = vtanh.pop %v1070
      %v1113 = vtanh.pop %v1075
      %v1114 = vtanh.pop %v1080
      %v1115 = vtanh.pop %v1085
      %v1116 = vtanh.pop %v1090
      %v1117 = vtanh.pop %v1095
      %v1118 = vtanh.pop %v1100
      %s1119 = scalar_lea.vmem %s3, 32
      %v1120 = vld [vmem:[%s1119] sm:$0xff]
      %v1121 = vld [vmem:[%s1119 + $0x8] sm:$0xff]
      %v1122 = vld [vmem:[%s1119 + $0x10] sm:$0xff]
      %v1123 = vld [vmem:[%s1119 + $0x18] sm:$0xff]
      %s1124 = scalar_lea.vmem %s4, 1
      %v1125 = vld [vmem:[%s1124] sm:$0x1]
      %v1127 = vlaneseq
      %v1128 = vshrl.u32 %v1127, 7
      %v1129 = vsub.s32 0, %v1128
      %v1130 = vrot.slane %v1125, %v1129
      %v1133 = vsel %vm542, %v1103, 0
      %v1136 = vsel %vm542, %v1104, 0
      %v1139 = vsel %vm542, %v1105, 0
      %v1142 = vsel %vm542, %v1106, 0
      %v1145 = vsel %vm542, %v1107, 0
      %v1148 = vsel %vm542, %v1108, 0
      %v1151 = vsel %vm542, %v1109, 0
      %v1154 = vsel %vm542, %v1110, 0
      %v1157 = vsel %vm542, %v1111, 0
      %v1160 = vsel %vm542, %v1112, 0
      %v1163 = vsel %vm542, %v1113, 0
      %v1166 = vsel %vm542, %v1114, 0
      %v1169 = vsel %vm542, %v1115, 0
      %v1172 = vsel %vm542, %v1116, 0
      %v1175 = vsel %vm542, %v1117, 0
      %v1178 = vsel %vm542, %v1118, 0
      %1180 = vmatprep.subr.mxu0 0.0
      %1181 = vmatpush1.msra.mxu0 %v1120
      %1182 = vmatprep.subr.mxu0 0.0
      %1183 = vmatpush1.msra.mxu0 %v1121
      %1184 = vmatprep.subr.mxu0 0.0
      %1185 = vmatpush1.msra.mxu0 %v1122
      %1186 = vmatprep.subr.mxu0 0.0
      %1187 = vmatpush1.msra.mxu0 %v1123
      %1188 = vmatprep.subr.mxu0 0.0
      %1189 = vmatpush1.msra.mxu0 0.0
      %1190 = vmatprep.subr.mxu0 0.0
      %1191 = vmatpush1.msra.mxu0 0.0
      %1192 = vmatprep.subr.mxu0 0.0
      %1193 = vmatpush1.msra.mxu0 0.0
      %1194 = vmatprep.subr.mxu0 0.0
      %1195 = vmatpush1.msra.mxu0 0.0
      %1196 = vmatprep.subr.mxu0 0.0
      %1197 = vmatpush1.msra.mxu0 0.0
      %1198 = vmatprep.subr.mxu0 0.0
      %1199 = vmatpush1.msra.mxu0 0.0
      %1200 = vmatprep.subr.mxu0 0.0
      %1201 = vmatpush1.msra.mxu0 0.0
      %1202 = vmatprep.subr.mxu0 0.0
      %1203 = vmatpush1.msra.mxu0 0.0
      %1204 = vmatprep.subr.mxu0 0.0
      %1205 = vmatpush1.msra.mxu0 0.0
      %1206 = vmatprep.subr.mxu0 0.0
      %1207 = vmatpush1.msra.mxu0 0.0
      %1208 = vmatprep.subr.mxu0 0.0
      %1209 = vmatpush1.msra.mxu0 0.0
      %1210 = vmatprep.subr.mxu0 0.0
      %1211 = vmatpush1.msra.mxu0 0.0
      %1212 = vmatprep.subr.mxu0 0.0
      %1213 = vmatpush1.msra.mxu0 0.0
      %1214 = vmatprep.subr.mxu0 0.0
      %1215 = vmatpush1.msra.mxu0 0.0
      %1216 = vmatprep.subr.mxu0 0.0
      %1217 = vmatpush1.msra.mxu0 0.0
      %1218 = vmatprep.subr.mxu0 0.0
      %1219 = vmatpush1.msra.mxu0 0.0
      %1220 = vmatprep.subr.mxu0 0.0
      %1221 = vmatpush1.msra.mxu0 0.0
      %1222 = vmatprep.subr.mxu0 0.0
      %1223 = vmatpush1.msra.mxu0 0.0
      %1224 = vmatprep.subr.mxu0 0.0
      %1225 = vmatpush1.msra.mxu0 0.0
      %1226 = vmatprep.subr.mxu0 0.0
      %1227 = vmatpush1.msra.mxu0 0.0
      %1228 = vmatprep.subr.mxu0 0.0
      %1229 = vmatpush1.msra.mxu0 0.0
      %1230 = vmatprep.subr.mxu0 0.0
      %1231 = vmatpush1.msra.mxu0 0.0
      %1232 = vmatprep.subr.mxu0 0.0
      %1233 = vmatpush1.msra.mxu0 0.0
      %1234 = vmatprep.subr.mxu0 0.0
      %1235 = vmatpush1.msra.mxu0 0.0
      %1236 = vmatprep.subr.mxu0 0.0
      %1237 = vmatpush1.msra.mxu0 0.0
      %1238 = vmatprep.subr.mxu0 0.0
      %1239 = vmatpush1.msra.mxu0 0.0
      %1240 = vmatprep.subr.mxu0 0.0
      %1241 = vmatpush1.msra.mxu0 0.0
      %1242 = vmatprep.subr.mxu0 0.0
      %1243 = vmatpush1.msra.mxu0 0.0
      %1244 = vmatprep.mubr.f32.mxu0 0.0
      %1245 = vmatmul.mubr.f32.gmra.mrb[0].mxu0 %v1133
      %v1246 = vpop.f32.mrb[0].mxu0
      %v1247 = vadd.f32 %v1130, %v1246
      %v1248 = vpop.f32.mrb[0].mxu0
      %1249 = vmatprep.mubr.f32.mxu0 0.0
      %1250 = vmatmul.mubr.f32.gmra.mrb[0].mxu0 %v1136
      %v1251 = vpop.f32.mrb[0].mxu0
      %v1252 = vadd.f32 %v1130, %v1251
      %v1253 = vpop.f32.mrb[0].mxu0
      %1254 = vmatprep.mubr.f32.mxu0 0.0
      %1255 = vmatmul.mubr.f32.gmra.mrb[0].mxu0 %v1139
      %v1256 = vpop.f32.mrb[0].mxu0
      %v1257 = vadd.f32 %v1130, %v1256
      %v1258 = vpop.f32.mrb[0].mxu0
      %1259 = vmatprep.mubr.f32.mxu0 0.0
      %1260 = vmatmul.mubr.f32.gmra.mrb[0].mxu0 %v1142
      %v1261 = vpop.f32.mrb[0].mxu0
      %v1262 = vadd.f32 %v1130, %v1261
      %v1263 = vpop.f32.mrb[0].mxu0
      %1264 = vmatprep.mubr.f32.mxu0 0.0
      %1265 = vmatmul.mubr.f32.gmra.mrb[0].mxu0 %v1145
      %v1266 = vpop.f32.mrb[0].mxu0
      %v1267 = vadd.f32 %v1130, %v1266
      %v1268 = vpop.f32.mrb[0].mxu0
      %1269 = vmatprep.mubr.f32.mxu0 0.0
      %1270 = vmatmul.mubr.f32.gmra.mrb[0].mxu0 %v1148
      %v1271 = vpop.f32.mrb[0].mxu0
      %v1272 = vadd.f32 %v1130, %v1271
      %v1273 = vpop.f32.mrb[0].mxu0
      %1274 = vmatprep.mubr.f32.mxu0 0.0
      %1275 = vmatmul.mubr.f32.gmra.mrb[0].mxu0 %v1151
      %v1276 = vpop.f32.mrb[0].mxu0
      %v1277 = vadd.f32 %v1130, %v1276
      %v1278 = vpop.f32.mrb[0].mxu0
      %1279 = vmatprep.mubr.f32.mxu0 0.0
      %1280 = vmatmul.mubr.f32.gmra.mrb[0].mxu0 %v1154
      %v1281 = vpop.f32.mrb[0].mxu0
      %v1282 = vadd.f32 %v1130, %v1281
      %v1283 = vpop.f32.mrb[0].mxu0
      %1284 = vmatprep.mubr.f32.mxu0 0.0
      %1285 = vmatmul.mubr.f32.gmra.mrb[0].mxu0 %v1157
      %v1286 = vpop.f32.mrb[0].mxu0
      %v1287 = vadd.f32 %v1130, %v1286
      %v1288 = vpop.f32.mrb[0].mxu0
      %1289 = vmatprep.mubr.f32.mxu0 0.0
      %1290 = vmatmul.mubr.f32.gmra.mrb[0].mxu0 %v1160
      %v1291 = vpop.f32.mrb[0].mxu0
      %v1292 = vadd.f32 %v1130, %v1291
      %v1293 = vpop.f32.mrb[0].mxu0
      %1294 = vmatprep.mubr.f32.mxu0 0.0
      %1295 = vmatmul.mubr.f32.gmra.mrb[0].mxu0 %v1163
      %v1296 = vpop.f32.mrb[0].mxu0
      %v1297 = vadd.f32 %v1130, %v1296
      %v1298 = vpop.f32.mrb[0].mxu0
      %1299 = vmatprep.mubr.f32.mxu0 0.0
      %1300 = vmatmul.mubr.f32.gmra.mrb[0].mxu0 %v1166
      %v1301 = vpop.f32.mrb[0].mxu0
      %v1302 = vadd.f32 %v1130, %v1301
      %v1303 = vpop.f32.mrb[0].mxu0
      %1304 = vmatprep.mubr.f32.mxu0 0.0
      %1305 = vmatmul.mubr.f32.gmra.mrb[0].mxu0 %v1169
      %v1306 = vpop.f32.mrb[0].mxu0
      %v1307 = vadd.f32 %v1130, %v1306
      %v1308 = vpop.f32.mrb[0].mxu0
      %1309 = vmatprep.mubr.f32.mxu0 0.0
      %1310 = vmatmul.mubr.f32.gmra.mrb[0].mxu0 %v1172
      %v1311 = vpop.f32.mrb[0].mxu0
      %v1312 = vadd.f32 %v1130, %v1311
      %v1313 = vpop.f32.mrb[0].mxu0
      %1314 = vmatprep.mubr.f32.mxu0 0.0
      %1315 = vmatmul.mubr.f32.gmra.mrb[0].mxu0 %v1175
      %v1316 = vpop.f32.mrb[0].mxu0
      %v1317 = vadd.f32 %v1130, %v1316
      %v1318 = vpop.f32.mrb[0].mxu0
      %1319 = vmatprep.mubr.f32.mxu0 0.0
      %1320 = vmatmul.mubr.f32.gmra.mrb[0].mxu0 %v1178
      %v1321 = vpop.f32.mrb[0].mxu0
      %v1322 = vadd.f32 %v1130, %v1321
      %v1323 = vpop.f32.mrb[0].mxu0
      %1324 = vdwg.mxu0
      %v1325 = vtanh.pop %v1247
      %v1326 = vtanh.pop %v1252
      %v1327 = vtanh.pop %v1257
      %v1328 = vtanh.pop %v1262
      %v1329 = vtanh.pop %v1267
      %v1330 = vtanh.pop %v1272
      %v1331 = vtanh.pop %v1277
      %v1332 = vtanh.pop %v1282
      %v1333 = vtanh.pop %v1287
      %v1334 = vtanh.pop %v1292
      %v1335 = vtanh.pop %v1297
      %v1336 = vtanh.pop %v1302
      %v1337 = vtanh.pop %v1307
      %v1338 = vtanh.pop %v1312
      %v1339 = vtanh.pop %v1317
      %v1340 = vtanh.pop %v1322
      %s1341 = scalar_lea.vmem %s5, 16
      %v1342 = vld [vmem:[%s1341] sm:$0xff]
      %v1343 = vld [vmem:[%s1341 + $0x8] sm:$0xff]
      %v1345 = vsel %vm321, %v1325, 0
      %v1348 = vsel %vm321, %v1326, 0
      %v1351 = vsel %vm321, %v1327, 0
      %v1354 = vsel %vm321, %v1328, 0
      %v1357 = vsel %vm321, %v1329, 0
      %v1360 = vsel %vm321, %v1330, 0
      %v1363 = vsel %vm321, %v1331, 0
      %v1366 = vsel %vm321, %v1332, 0
      %v1369 = vsel %vm321, %v1333, 0
      %v1372 = vsel %vm321, %v1334, 0
      %v1375 = vsel %vm321, %v1335, 0
      %v1378 = vsel %vm321, %v1336, 0
      %v1381 = vsel %vm321, %v1337, 0
      %v1384 = vsel %vm321, %v1338, 0
      %v1387 = vsel %vm321, %v1339, 0
      %v1390 = vsel %vm321, %v1340, 0
      %1392 = vmatprep.subr.mxu0 0.0
      %1393 = vmatpush1.msra.mxu0 %v1342
      %1394 = vmatprep.subr.mxu0 0.0
      %1395 = vmatpush1.msra.mxu0 %v1343
      %1396 = vmatprep.subr.mxu0 0.0
      %1397 = vmatpush1.msra.mxu0 0.0
      %1398 = vmatprep.subr.mxu0 0.0
      %1399 = vmatpush1.msra.mxu0 0.0
      %1400 = vmatprep.subr.mxu0 0.0
      %1401 = vmatpush1.msra.mxu0 0.0
      %1402 = vmatprep.subr.mxu0 0.0
      %1403 = vmatpush1.msra.mxu0 0.0
      %1404 = vmatprep.subr.mxu0 0.0
      %1405 = vmatpush1.msra.mxu0 0.0
      %1406 = vmatprep.subr.mxu0 0.0
      %1407 = vmatpush1.msra.mxu0 0.0
      %1408 = vmatprep.subr.mxu0 0.0
      %1409 = vmatpush1.msra.mxu0 0.0
      %1410 = vmatprep.subr.mxu0 0.0
      %1411 = vmatpush1.msra.mxu0 0.0
      %1412 = vmatprep.subr.mxu0 0.0
      %1413 = vmatpush1.msra.mxu0 0.0
      %1414 = vmatprep.subr.mxu0 0.0
      %1415 = vmatpush1.msra.mxu0 0.0
      %1416 = vmatprep.subr.mxu0 0.0
      %1417 = vmatpush1.msra.mxu0 0.0
      %1418 = vmatprep.subr.mxu0 0.0
      %1419 = vmatpush1.msra.mxu0 0.0
      %1420 = vmatprep.subr.mxu0 0.0
      %1421 = vmatpush1.msra.mxu0 0.0
      %1422 = vmatprep.subr.mxu0 0.0
      %1423 = vmatpush1.msra.mxu0 0.0
      %1424 = vmatprep.subr.mxu0 0.0
      %1425 = vmatpush1.msra.mxu0 0.0
      %1426 = vmatprep.subr.mxu0 0.0
      %1427 = vmatpush1.msra.mxu0 0.0
      %1428 = vmatprep.subr.mxu0 0.0
      %1429 = vmatpush1.msra.mxu0 0.0
      %1430 = vmatprep.subr.mxu0 0.0
      %1431 = vmatpush1.msra.mxu0 0.0
      %1432 = vmatprep.subr.mxu0 0.0
      %1433 = vmatpush1.msra.mxu0 0.0
      %1434 = vmatprep.subr.mxu0 0.0
      %1435 = vmatpush1.msra.mxu0 0.0
      %1436 = vmatprep.subr.mxu0 0.0
      %1437 = vmatpush1.msra.mxu0 0.0
      %1438 = vmatprep.subr.mxu0 0.0
      %1439 = vmatpush1.msra.mxu0 0.0
      %1440 = vmatprep.subr.mxu0 0.0
      %1441 = vmatpush1.msra.mxu0 0.0
      %1442 = vmatprep.subr.mxu0 0.0
      %1443 = vmatpush1.msra.mxu0 0.0
      %1444 = vmatprep.subr.mxu0 0.0
      %1445 = vmatpush1.msra.mxu0 0.0
      %1446 = vmatprep.subr.mxu0 0.0
      %1447 = vmatpush1.msra.mxu0 0.0
      %1448 = vmatprep.subr.mxu0 0.0
      %1449 = vmatpush1.msra.mxu0 0.0
      %1450 = vmatprep.subr.mxu0 0.0
      %1451 = vmatpush1.msra.mxu0 0.0
      %1452 = vmatprep.subr.mxu0 0.0
      %1453 = vmatpush1.msra.mxu0 0.0
      %1454 = vmatprep.subr.mxu0 0.0
      %1455 = vmatpush1.msra.mxu0 0.0
      %1456 = vmatprep.mubr.f32.mxu0 0.0
      %1457 = vmatmul.mubr.f32.gmra.mrb[0].mxu0 %v1345
      %v1458 = vpop.f32.mrb[0].mxu0
      %v1459 = vadd.f32 0.0, %v1458
      %v1460 = vpop.f32.mrb[0].mxu0
      %1461 = vmatprep.mubr.f32.mxu0 0.0
      %1462 = vmatmul.mubr.f32.gmra.mrb[0].mxu0 %v1348
      %v1463 = vpop.f32.mrb[0].mxu0
      %v1464 = vadd.f32 0.0, %v1463
      %v1465 = vpop.f32.mrb[0].mxu0
      %1466 = vmatprep.mubr.f32.mxu0 0.0
      %1467 = vmatmul.mubr.f32.gmra.mrb[0].mxu0 %v1351
      %v1468 = vpop.f32.mrb[0].mxu0
      %v1469 = vadd.f32 0.0, %v1468
      %v1470 = vpop.f32.mrb[0].mxu0
      %1471 = vmatprep.mubr.f32.mxu0 0.0
      %1472 = vmatmul.mubr.f32.gmra.mrb[0].mxu0 %v1354
      %v1473 = vpop.f32.mrb[0].mxu0
      %v1474 = vadd.f32 0.0, %v1473
      %v1475 = vpop.f32.mrb[0].mxu0
      %1476 = vmatprep.mubr.f32.mxu0 0.0
      %1477 = vmatmul.mubr.f32.gmra.mrb[0].mxu0 %v1357
      %v1478 = vpop.f32.mrb[0].mxu0
      %v1479 = vadd.f32 0.0, %v1478
      %v1480 = vpop.f32.mrb[0].mxu0
      %1481 = vmatprep.mubr.f32.mxu0 0.0
      %1482 = vmatmul.mubr.f32.gmra.mrb[0].mxu0 %v1360
      %v1483 = vpop.f32.mrb[0].mxu0
      %v1484 = vadd.f32 0.0, %v1483
      %v1485 = vpop.f32.mrb[0].mxu0
      %1486 = vmatprep.mubr.f32.mxu0 0.0
      %1487 = vmatmul.mubr.f32.gmra.mrb[0].mxu0 %v1363
      %v1488 = vpop.f32.mrb[0].mxu0
      %v1489 = vadd.f32 0.0, %v1488
      %v1490 = vpop.f32.mrb[0].mxu0
      %1491 = vmatprep.mubr.f32.mxu0 0.0
      %1492 = vmatmul.mubr.f32.gmra.mrb[0].mxu0 %v1366
      %v1493 = vpop.f32.mrb[0].mxu0
      %v1494 = vadd.f32 0.0, %v1493
      %v1495 = vpop.f32.mrb[0].mxu0
      %1496 = vmatprep.mubr.f32.mxu0 0.0
      %1497 = vmatmul.mubr.f32.gmra.mrb[0].mxu0 %v1369
      %v1498 = vpop.f32.mrb[0].mxu0
      %v1499 = vadd.f32 0.0, %v1498
      %v1500 = vpop.f32.mrb[0].mxu0
      %1501 = vmatprep.mubr.f32.mxu0 0.0
      %1502 = vmatmul.mubr.f32.gmra.mrb[0].mxu0 %v1372
      %v1503 = vpop.f32.mrb[0].mxu0
      %v1504 = vadd.f32 0.0, %v1503
      %v1505 = vpop.f32.mrb[0].mxu0
      %1506 = vmatprep.mubr.f32.mxu0 0.0
      %1507 = vmatmul.mubr.f32.gmra.mrb[0].mxu0 %v1375
      %v1508 = vpop.f32.mrb[0].mxu0
      %v1509 = vadd.f32 0.0, %v1508
      %v1510 = vpop.f32.mrb[0].mxu0
      %1511 = vmatprep.mubr.f32.mxu0 0.0
      %1512 = vmatmul.mubr.f32.gmra.mrb[0].mxu0 %v1378
      %v1513 = vpop.f32.mrb[0].mxu0
      %v1514 = vadd.f32 0.0, %v1513
      %v1515 = vpop.f32.mrb[0].mxu0
      %1516 = vmatprep.mubr.f32.mxu0 0.0
      %1517 = vmatmul.mubr.f32.gmra.mrb[0].mxu0 %v1381
      %v1518 = vpop.f32.mrb[0].mxu0
      %v1519 = vadd.f32 0.0, %v1518
      %v1520 = vpop.f32.mrb[0].mxu0
      %1521 = vmatprep.mubr.f32.mxu0 0.0
      %1522 = vmatmul.mubr.f32.gmra.mrb[0].mxu0 %v1384
      %v1523 = vpop.f32.mrb[0].mxu0
      %v1524 = vadd.f32 0.0, %v1523
      %v1525 = vpop.f32.mrb[0].mxu0
      %1526 = vmatprep.mubr.f32.mxu0 0.0
      %1527 = vmatmul.mubr.f32.gmra.mrb[0].mxu0 %v1387
      %v1528 = vpop.f32.mrb[0].mxu0
      %v1529 = vadd.f32 0.0, %v1528
      %v1530 = vpop.f32.mrb[0].mxu0
      %1531 = vmatprep.mubr.f32.mxu0 0.0
      %1532 = vmatmul.mubr.f32.gmra.mrb[0].mxu0 %v1390
      %v1533 = vpop.f32.mrb[0].mxu0
      %v1534 = vadd.f32 0.0, %v1533
      %v1535 = vpop.f32.mrb[0].mxu0
      %1536 = vdwg.mxu0
      %1537 = vrot.lane.b32.xlu0 %v1325, 16
      %v1538 = vpop.permute.xlu0 %1537
      %1539 = vrot.lane.b32.xlu0 %v1326, 16
      %v1540 = vpop.permute.xlu0 %1539
      %1541 = vrot.lane.b32.xlu0 %v1327, 16
      %v1542 = vpop.permute.xlu0 %1541
      %1543 = vrot.lane.b32.xlu0 %v1328, 16
      %v1544 = vpop.permute.xlu0 %1543
      %1545 = vrot.lane.b32.xlu0 %v1329, 16
      %v1546 = vpop.permute.xlu0 %1545
      %1547 = vrot.lane.b32.xlu0 %v1330, 16
      %v1548 = vpop.permute.xlu0 %1547
      %1549 = vrot.lane.b32.xlu0 %v1331, 16
      %v1550 = vpop.permute.xlu0 %1549
      %1551 = vrot.lane.b32.xlu0 %v1332, 16
      %v1552 = vpop.permute.xlu0 %1551
      %1553 = vrot.lane.b32.xlu0 %v1333, 16
      %v1554 = vpop.permute.xlu0 %1553
      %1555 = vrot.lane.b32.xlu0 %v1334, 16
      %v1556 = vpop.permute.xlu0 %1555
      %1557 = vrot.lane.b32.xlu0 %v1335, 16
      %v1558 = vpop.permute.xlu0 %1557
      %1559 = vrot.lane.b32.xlu0 %v1336, 16
      %v1560 = vpop.permute.xlu0 %1559
      %1561 = vrot.lane.b32.xlu0 %v1337, 16
      %v1562 = vpop.permute.xlu0 %1561
      %1563 = vrot.lane.b32.xlu0 %v1338, 16
      %v1564 = vpop.permute.xlu0 %1563
      %1565 = vrot.lane.b32.xlu0 %v1339, 16
      %v1566 = vpop.permute.xlu0 %1565
      %1567 = vrot.lane.b32.xlu0 %v1340, 16
      %v1568 = vpop.permute.xlu0 %1567
      %v1585 = vsel %vm321, %v736, %v1538
      %v1586 = vsel %vm321, %v737, %v1540
      %v1587 = vsel %vm321, %v738, %v1542
      %v1588 = vsel %vm321, %v739, %v1544
      %v1589 = vsel %vm321, %v740, %v1546
      %v1590 = vsel %vm321, %v741, %v1548
      %v1591 = vsel %vm321, %v742, %v1550
      %v1592 = vsel %vm321, %v743, %v1552
      %v1593 = vsel %vm321, %v744, %v1554
      %v1594 = vsel %vm321, %v745, %v1556
      %v1595 = vsel %vm321, %v746, %v1558
      %v1596 = vsel %vm321, %v747, %v1560
      %v1597 = vsel %vm321, %v748, %v1562
      %v1598 = vsel %vm321, %v749, %v1564
      %v1599 = vsel %vm321, %v750, %v1566
      %v1600 = vsel %vm321, %v751, %v1568
      %v1601 = vpack.c.bf16 %v1586, %v1585
      %v1602 = vpack.c.bf16 %v1588, %v1587
      %v1603 = vpack.c.bf16 %v1590, %v1589
      %v1604 = vpack.c.bf16 %v1592, %v1591
      %v1605 = vpack.c.bf16 %v1594, %v1593
      %v1606 = vpack.c.bf16 %v1596, %v1595
      %v1607 = vpack.c.bf16 %v1598, %v1597
      %v1608 = vpack.c.bf16 %v1600, %v1599
      %v1617 = vunpack.c.l.b16 %v1601
      %v1618 = vunpack.c.h.b16 %v1601
      %v1619 = vunpack.c.l.b16 %v1602
      %v1620 = vunpack.c.h.b16 %v1602
      %v1621 = vunpack.c.l.b16 %v1603
      %v1622 = vunpack.c.h.b16 %v1603
      %v1623 = vunpack.c.l.b16 %v1604
      %v1624 = vunpack.c.h.b16 %v1604
      %v1625 = vunpack.c.l.b16 %v1605
      %v1626 = vunpack.c.h.b16 %v1605
      %v1627 = vunpack.c.l.b16 %v1606
      %v1628 = vunpack.c.h.b16 %v1606
      %v1629 = vunpack.c.l.b16 %v1607
      %v1630 = vunpack.c.h.b16 %v1607
      %v1631 = vunpack.c.l.b16 %v1608
      %v1632 = vunpack.c.h.b16 %v1608
      %v1633 = vpack.c.b16 %v1617, %v1617
      %v1634 = vpack.c.b16 %v1618, %v1618
      %v1635 = vpack.c.b16 %v1619, %v1619
      %v1636 = vpack.c.b16 %v1620, %v1620
      %v1637 = vpack.c.b16 %v1621, %v1621
      %v1638 = vpack.c.b16 %v1622, %v1622
      %v1639 = vpack.c.b16 %v1623, %v1623
      %v1640 = vpack.c.b16 %v1624, %v1624
      %v1641 = vpack.c.b16 %v1625, %v1625
      %v1642 = vpack.c.b16 %v1626, %v1626
      %v1643 = vpack.c.b16 %v1627, %v1627
      %v1644 = vpack.c.b16 %v1628, %v1628
      %v1645 = vpack.c.b16 %v1629, %v1629
      %v1646 = vpack.c.b16 %v1630, %v1630
      %v1647 = vpack.c.b16 %v1631, %v1631
      %v1648 = vpack.c.b16 %v1632, %v1632
      %vm1665 = vcmask 257024
      %1666 = vst.msk [vmem:[%s288] sm:$0xf] %vm1665, %v1633
      %1667 = vst.msk [vmem:[%s288 + $0x4] sm:$0xf] %vm1665, %v1634
      %1668 = vst.msk [vmem:[%s288 + $0x8] sm:$0xf] %vm1665, %v1635
      %1669 = vst.msk [vmem:[%s288 + $0xc] sm:$0xf] %vm1665, %v1636
      %1670 = vst.msk [vmem:[%s288 + $0x10] sm:$0xf] %vm1665, %v1637
      %1671 = vst.msk [vmem:[%s288 + $0x14] sm:$0xf] %vm1665, %v1638
      %1672 = vst.msk [vmem:[%s288 + $0x18] sm:$0xf] %vm1665, %v1639
      %1673 = vst.msk [vmem:[%s288 + $0x1c] sm:$0xf] %vm1665, %v1640
      %1674 = vst.msk [vmem:[%s288 + $0x20] sm:$0xf] %vm1665, %v1641
      %1675 = vst.msk [vmem:[%s288 + $0x24] sm:$0xf] %vm1665, %v1642
      %1676 = vst.msk [vmem:[%s288 + $0x28] sm:$0xf] %vm1665, %v1643
      %1677 = vst.msk [vmem:[%s288 + $0x2c] sm:$0xf] %vm1665, %v1644
      %1678 = vst.msk [vmem:[%s288 + $0x30] sm:$0xf] %vm1665, %v1645
      %1679 = vst.msk [vmem:[%s288 + $0x34] sm:$0xf] %vm1665, %v1646
      %1680 = vst.msk [vmem:[%s288 + $0x38] sm:$0xf] %vm1665, %v1647
      %1681 = vst.msk [vmem:[%s288 + $0x3c] sm:$0xf] %vm1665, %v1648
      %1698 = vrot.lane.b32.xlu0 %v1459, 16
      %v1699 = vpop.permute.xlu0 %1698
      %1700 = vrot.lane.b32.xlu0 %v1464, 16
      %v1701 = vpop.permute.xlu0 %1700
      %1702 = vrot.lane.b32.xlu0 %v1469, 16
      %v1703 = vpop.permute.xlu0 %1702
      %1704 = vrot.lane.b32.xlu0 %v1474, 16
      %v1705 = vpop.permute.xlu0 %1704
      %1706 = vrot.lane.b32.xlu0 %v1479, 16
      %v1707 = vpop.permute.xlu0 %1706
      %1708 = vrot.lane.b32.xlu0 %v1484, 16
      %v1709 = vpop.permute.xlu0 %1708
      %1710 = vrot.lane.b32.xlu0 %v1489, 16
      %v1711 = vpop.permute.xlu0 %1710
      %1712 = vrot.lane.b32.xlu0 %v1494, 16
      %v1713 = vpop.permute.xlu0 %1712
      %1714 = vrot.lane.b32.xlu0 %v1499, 16
      %v1715 = vpop.permute.xlu0 %1714
      %1716 = vrot.lane.b32.xlu0 %v1504, 16
      %v1717 = vpop.permute.xlu0 %1716
      %1718 = vrot.lane.b32.xlu0 %v1509, 16
      %v1719 = vpop.permute.xlu0 %1718
      %1720 = vrot.lane.b32.xlu0 %v1514, 16
      %v1721 = vpop.permute.xlu0 %1720
      %1722 = vrot.lane.b32.xlu0 %v1519, 16
      %v1723 = vpop.permute.xlu0 %1722
      %1724 = vrot.lane.b32.xlu0 %v1524, 16
      %v1725 = vpop.permute.xlu0 %1724
      %1726 = vrot.lane.b32.xlu0 %v1529, 16
      %v1727 = vpop.permute.xlu0 %1726
      %1728 = vrot.lane.b32.xlu0 %v1534, 16
      %v1729 = vpop.permute.xlu0 %1728
      %v1746 = vsel %vm321, %v869, %v1699
      %v1747 = vsel %vm321, %v874, %v1701
      %v1748 = vsel %vm321, %v879, %v1703
      %v1749 = vsel %vm321, %v884, %v1705
      %v1750 = vsel %vm321, %v889, %v1707
      %v1751 = vsel %vm321, %v894, %v1709
      %v1752 = vsel %vm321, %v899, %v1711
      %v1753 = vsel %vm321, %v904, %v1713
      %v1754 = vsel %vm321, %v909, %v1715
      %v1755 = vsel %vm321, %v914, %v1717
      %v1756 = vsel %vm321, %v919, %v1719
      %v1757 = vsel %vm321, %v924, %v1721
      %v1758 = vsel %vm321, %v929, %v1723
      %v1759 = vsel %vm321, %v934, %v1725
      %v1760 = vsel %vm321, %v939, %v1727
      %v1761 = vsel %vm321, %v944, %v1729
      %v1762 = vpack.c.bf16 %v1747, %v1746
      %v1763 = vpack.c.bf16 %v1749, %v1748
      %v1764 = vpack.c.bf16 %v1751, %v1750
      %v1765 = vpack.c.bf16 %v1753, %v1752
      %v1766 = vpack.c.bf16 %v1755, %v1754
      %v1767 = vpack.c.bf16 %v1757, %v1756
      %v1768 = vpack.c.bf16 %v1759, %v1758
      %v1769 = vpack.c.bf16 %v1761, %v1760
      %v1778 = vunpack.c.l.b16 %v1762
      %v1779 = vunpack.c.h.b16 %v1762
      %v1780 = vunpack.c.l.b16 %v1763
      %v1781 = vunpack.c.h.b16 %v1763
      %v1782 = vunpack.c.l.b16 %v1764
      %v1783 = vunpack.c.h.b16 %v1764
      %v1784 = vunpack.c.l.b16 %v1765
      %v1785 = vunpack.c.h.b16 %v1765
      %v1786 = vunpack.c.l.b16 %v1766
      %v1787 = vunpack.c.h.b16 %v1766
      %v1788 = vunpack.c.l.b16 %v1767
      %v1789 = vunpack.c.h.b16 %v1767
      %v1790 = vunpack.c.l.b16 %v1768
      %v1791 = vunpack.c.h.b16 %v1768
      %v1792 = vunpack.c.l.b16 %v1769
      %v1793 = vunpack.c.h.b16 %v1769
      %v1794 = vpack.c.b16 %v1778, %v1778
      %v1795 = vpack.c.b16 %v1779, %v1779
      %v1796 = vpack.c.b16 %v1780, %v1780
      %v1797 = vpack.c.b16 %v1781, %v1781
      %v1798 = vpack.c.b16 %v1782, %v1782
      %v1799 = vpack.c.b16 %v1783, %v1783
      %v1800 = vpack.c.b16 %v1784, %v1784
      %v1801 = vpack.c.b16 %v1785, %v1785
      %v1802 = vpack.c.b16 %v1786, %v1786
      %v1803 = vpack.c.b16 %v1787, %v1787
      %v1804 = vpack.c.b16 %v1788, %v1788
      %v1805 = vpack.c.b16 %v1789, %v1789
      %v1806 = vpack.c.b16 %v1790, %v1790
      %v1807 = vpack.c.b16 %v1791, %v1791
      %v1808 = vpack.c.b16 %v1792, %v1792
      %v1809 = vpack.c.b16 %v1793, %v1793
      %1826 = vst.msk [vmem:[%s294] sm:$0xf] %vm1665, %v1794
      %1827 = vst.msk [vmem:[%s294 + $0x4] sm:$0xf] %vm1665, %v1795
      %1828 = vst.msk [vmem:[%s294 + $0x8] sm:$0xf] %vm1665, %v1796
      %1829 = vst.msk [vmem:[%s294 + $0xc] sm:$0xf] %vm1665, %v1797
      %1830 = vst.msk [vmem:[%s294 + $0x10] sm:$0xf] %vm1665, %v1798
      %1831 = vst.msk [vmem:[%s294 + $0x14] sm:$0xf] %vm1665, %v1799
      %1832 = vst.msk [vmem:[%s294 + $0x18] sm:$0xf] %vm1665, %v1800
      %1833 = vst.msk [vmem:[%s294 + $0x1c] sm:$0xf] %vm1665, %v1801
      %1834 = vst.msk [vmem:[%s294 + $0x20] sm:$0xf] %vm1665, %v1802
      %1835 = vst.msk [vmem:[%s294 + $0x24] sm:$0xf] %vm1665, %v1803
      %1836 = vst.msk [vmem:[%s294 + $0x28] sm:$0xf] %vm1665, %v1804
      %1837 = vst.msk [vmem:[%s294 + $0x2c] sm:$0xf] %vm1665, %v1805
      %1838 = vst.msk [vmem:[%s294 + $0x30] sm:$0xf] %vm1665, %v1806
      %1839 = vst.msk [vmem:[%s294 + $0x34] sm:$0xf] %vm1665, %v1807
      %1840 = vst.msk [vmem:[%s294 + $0x38] sm:$0xf] %vm1665, %v1808
      %1841 = vst.msk [vmem:[%s294 + $0x3c] sm:$0xf] %vm1665, %v1809
      %s1842 = smul.u32 16, %s19
      %p1843 = scmp.lt.s32.totalorder %s1842, 31
      %s1844 = scalar_select %p1843, %s1842, 31
      %s1845 = smul.addr %s1844, 4
      %s1846 = scalar_lea.vmem %s6, %s1845
      %s1847 = smul.u32 16, %s19
      %p1848 = scmp.lt.s32.totalorder %s1847, 31
      %s1849 = scalar_select %p1848, %s1847, 31
      %s1850 = smul.addr %s1849, 4
      %s1851 = scalar_lea.vmem %s7, %s1850
      // Predicated region
      $region45: #{tpu_custom_call.1} parent=43 // pred_check
        %p1852 = pneg %p168
      $region46: #{tpu_custom_call.1} parent=43 // pred_check_branch
        %1854 = sbr.rel (%p1852) target = $region48
      $region47: #{tpu_custom_call.1} parent=43 // pred_region
        %s1855 = smul.u32 16, %s19
      $region48: #{tpu_custom_call.1} parent=43 // pred_fallthru
        _
      // Predicated region
      $region49: #{tpu_custom_call.1} parent=43 // pred_check
        %p1856 = pneg %p194
      $region50: #{tpu_custom_call.1} parent=43 // pred_check_branch
        %1858 = sbr.rel (%p1856) target = $region52
      $region51: #{tpu_custom_call.1} parent=43 // pred_region
        %s1859 = smul.u32 16, %s19
      $region52: #{tpu_custom_call.1} parent=43 // pred_fallthru
        _
    $region44: #{tpu_custom_call.1} parent=5 // pred_fallthru
      _
    %p1860 = scmp.le.s32.totalorder 2, %s14
    // Predicated region
    $region53: #{tpu_custom_call.1} parent=5 // pred_check
      %p1861 = pneg %p1860
    $region54: #{tpu_custom_call.1} parent=5 // pred_check_branch
      %1863 = sbr.rel (%p1861) target = $region56
    $region55: #{tpu_custom_call.1} parent=5 // pred_region
      %s1864 = ssub.s32 %s14, 2
      // Predicated region
      $region57: #{tpu_custom_call.1} parent=55 // pred_check
        %p1865 = pneg %p174
      $region58: #{tpu_custom_call.1} parent=55 // pred_check_branch
        %1867 = sbr.rel (%p1865) target = $region60
      $region59: #{tpu_custom_call.1} parent=55 // pred_region
        %s1868 = smul.u32 16, %s20
        %p1869 = scmp.lt.s32.totalorder %s1868, 31
        %s1870 = scalar_select %p1869, %s1868, 31
        %s1871 = smul.addr %s1870, 4
        %s1872 = scalar_lea.vmem %s6, %s1871
      $region60: #{tpu_custom_call.1} parent=55 // pred_fallthru
        _
      // Predicated region
      $region61: #{tpu_custom_call.1} parent=55 // pred_check
        %p1873 = pneg %p200
      $region62: #{tpu_custom_call.1} parent=55 // pred_check_branch
        %1875 = sbr.rel (%p1873) target = $region64
      $region63: #{tpu_custom_call.1} parent=55 // pred_region
        %s1876 = smul.u32 16, %s20
        %p1877 = scmp.lt.s32.totalorder %s1876, 31
        %s1878 = scalar_select %p1877, %s1876, 31
        %s1879 = smul.addr %s1878, 4
        %s1880 = scalar_lea.vmem %s7, %s1879
      $region64: #{tpu_custom_call.1} parent=55 // pred_fallthru
        _
    $region56: #{tpu_custom_call.1} parent=5 // pred_fallthru
      _
  $region6: #{tpu_custom_call.1} parent=0 // loop_footer
    %s18 = sadd.s32 1, %s14
  $region7: #{tpu_custom_call.1} parent=0 // loop_footer_branch
    %13 = sbr.rel target = $region3
  $region8: #{tpu_custom_call.1} parent=0 // loop_exit
    _

</llo_original>
